<compile_context>
chip_gen: v5e
topology: v5e:2x2
jax: 0.10.0
libtpu: 0.0.40
codegen_flags: <defaults>
</compile_context>

<pallas_src>
import math
import jax
import jax.numpy as jnp
from jax.experimental import pallas as pl
from jax.experimental.pallas import tpu as pltpu


def _round_up(x, m):
    return ((x + m - 1) // m) * m


def _device_kind():
    try:
        return jax.devices()[0].device_kind.lower()
    except Exception:
        return ""


def _default_tiles():
    # 128-wide MXU generations (v2/v3/v4/v5e/v5p) -> 128 tiles;
    # v6e / v7x (256x256 MXU) -> 256 tiles.
    kind = _device_kind()
    if any(tag in kind for tag in ("v2", "v3", "v4", "v5")):
        return 128, 128
    return 256, 256


def _vmem_capacity_bytes():
    try:
        cap = getattr(pltpu.get_tpu_info(), "vmem_capacity_bytes", None)
        if cap:
            return int(cap)
    except Exception:
        pass
    return 64 << 20  # conservative fallback (v7x per-TensorCore VMEM)


def _vmem_estimate(layout, n_pad, f_pad, in_f, tm, tn, esz):
    """Rough resident-VMEM estimate for a given layout / tiling."""
    support_cols = f_pad if layout == "row_outer" else tn
    return (n_pad * in_f * esz            # x, resident (single-buffered)
            + 2 * in_f * tn * esz         # W column block (double-buffered)
            + 2 * tm * n_pad * esz        # adj row tile (double-buffered)
            + 2 * tn * 4                  # bias block (f32)
            + 2 * tm * tn * 4             # output tile (f32)
            + n_pad * support_cols * esz)  # support scratch


# ---------------- fused Pallas kernels ----------------

def _gcn_kernel_adj_once(x_ref, w_ref, adj_ref, bias_ref, o_ref, support_ref):
    """Row-outer layout: grid = (adj row tiles [arbitrary], col blocks).

    support[:, j-block] is computed once during the first row sweep (i == 0)
    into the full-width VMEM scratch and reused by every later adj row tile,
    so the N^2 adjacency streams from HBM exactly once.
    """
    tn = w_ref.shape[1]
    col = pl.multiple_of(pl.program_id(1) * tn, tn)

    @pl.when(pl.program_id(0) == 0)
    def _():
        support_ref[:, pl.ds(col, tn)] = jnp.dot(
            x_ref[...], w_ref[...],
            preferred_element_type=jnp.float32).astype(support_ref.dtype)

    o_ref[...] = (
        jnp.dot(adj_ref[...], support_ref[:, pl.ds(col, tn)],
                preferred_element_type=jnp.float32)
        + bias_ref[...].astype(jnp.float32)
    ).astype(o_ref.dtype)


def _gcn_kernel_col_outer(x_ref, w_ref, adj_ref, bias_ref, o_ref, support_ref):
    """Column-outer fallback: grid = (col blocks [parallel], adj row tiles).

    Smaller (n_pad, tn) support scratch (lower VMEM), at the cost of
    re-streaming the adjacency once per out-feature column block.
    """
    @pl.when(pl.program_id(1) == 0)
    def _():
        support_ref[...] = jnp.dot(
            x_ref[...], w_ref[...],
            preferred_element_type=jnp.float32).astype(support_ref.dtype)

    o_ref[...] = (
        jnp.dot(adj_ref[...], support_ref[...],
                preferred_element_type=jnp.float32)
        + bias_ref[...].astype(jnp.float32)
    ).astype(o_ref.dtype)


# ---------------- wrapper ----------------

def graph_convolution(x, adj, weight, bias, *, tm=None, tn=None,
                      use_bf16_inputs=True, layout="auto"):
    """GCN forward: adj @ (x @ weight) + bias as one fused Pallas TPU kernel.

    torch.spmm(adj, support) is a sparse-dense matmul; with the dense
    adjacency it is semantically a dense matmul, so it runs on the MXU.
    """
    N, in_f = x.shape
    assert adj.shape == (N, N)
    in_f2, out_f = weight.shape
    assert in_f2 == in_f and bias.shape == (out_f,)
    assert layout in ("auto", "row_outer", "col_outer")
    out_dtype = jnp.float32

    # bf16 inputs + f32 MXU accumulation is the default perf path on all gens.
    compute_dtype = jnp.bfloat16 if use_bf16_inputs else jnp.float32
    esz = jnp.dtype(compute_dtype).itemsize

    # ---- generation-aware tiles & VMEM budget ----
    auto_tn = tn is None
    d_tm, d_tn = _default_tiles()
    tm = d_tm if tm is None else tm
    tn = d_tn if tn is None else tn
    tm = min(tm, _round_up(N, 128))
    tn = min(tn, _round_up(out_f, 128))
    # Prefer >= 2 out-feature column blocks so the "parallel" column axis can
    # shard across v7x's two TensorCores (megacore).
    if (auto_tn and tn > 128 and _round_up(out_f, tn) // tn == 1
            and _round_up(out_f, 128) >= 256):
        tn = 128
    # TODO(synk): when out_features <= 128 there is a single column block and
    # one v7x TensorCore idles; a per-core SMEM "which column block is loaded"
    # tag would let the row axis be parallel too.

    vmem_cap = _vmem_capacity_bytes()
    vmem_limit = int(0.85 * vmem_cap)   # compiler scoped-VMEM limit
    budget = int(0.70 * vmem_cap)       # headroom for pipeline/compiler scratch

    est_layout = layout if layout != "auto" else "row_outer"
    while True:
        n_pad, f_pad = _round_up(N, tm), _round_up(out_f, tn)
        if _vmem_estimate(est_layout, n_pad, f_pad, in_f, tm, tn, esz) <= budget:
            break
        if tn > 128:
            tn //= 2
        elif tm > 128:
            tm //= 2
        else:
            break
    n_pad, f_pad = _round_up(N, tm), _round_up(out_f, tn)

    if layout == "auto":
        fits = _vmem_estimate("row_outer", n_pad, f_pad, in_f, tm, tn, esz) <= budget
        layout = "row_outer" if fits else "col_outer"
    # TODO(synk): add a K-tiled (inner "arbitrary" contraction axis) fallback
    # for graphs whose resident x / adj-row-tile / support buffers exceed VMEM
    # even at 128x128 tiles (matters first on v7x's 64 MiB/TC).

    # ---- padding (zero padding is exact; sliced off the output) ----
    if n_pad != N:
        x = jnp.pad(x, ((0, n_pad - N), (0, 0)))
        adj = jnp.pad(adj, ((0, n_pad - N), (0, n_pad - N)))
    if f_pad != out_f:
        weight = jnp.pad(weight, ((0, 0), (0, f_pad - out_f)))
        bias = jnp.pad(bias, (0, f_pad - out_f))
    bias2d = bias.reshape(1, f_pad).astype(jnp.float32)
    x = x.astype(compute_dtype)
    adj = adj.astype(compute_dtype)
    weight = weight.astype(compute_dtype)

    n_row_blocks = n_pad // tm
    n_col_blocks = f_pad // tn

    adj_reads = 1 if layout == "row_outer" else n_col_blocks
    cost = pl.CostEstimate(
        flops=2 * n_pad * in_f * f_pad + 2 * n_pad * n_pad * f_pad,
        transcendentals=0,
        bytes_accessed=int(n_pad * in_f * esz + in_f * f_pad * esz
                           + adj_reads * n_pad * n_pad * esz
                           + f_pad * 4 + n_pad * f_pad * 4),
    )

    def _build(single_buffer_x, parallel_cols):
        def x_spec(index_map):
            if single_buffer_x:
                # x is never re-fetched (constant index_map): one buffer only.
                return pl.BlockSpec((n_pad, in_f), index_map,
                                    pipeline_mode=pl.Buffered(1))
            return pl.BlockSpec((n_pad, in_f), index_map)

        if layout == "row_outer":
            grid = (n_row_blocks, n_col_blocks)
            in_specs = [
                x_spec(lambda i, j: (0, 0)),                      # x (resident)
                pl.BlockSpec((in_f, tn), lambda i, j: (0, j)),    # W col block
                pl.BlockSpec((tm, n_pad), lambda i, j: (i, 0)),   # adj row tile
                pl.BlockSpec((1, tn), lambda i, j: (0, j)),       # bias block
            ]
            out_spec = pl.BlockSpec((tm, tn), lambda i, j: (i, j))
            scratch = [pltpu.VMEM((n_pad, f_pad), compute_dtype)]
            # Row axis carries the support-scratch reuse -> must stay
            # "arbitrary"; the column axis may shard across v7x's two TCs.
            dims = ("arbitrary", "parallel" if parallel_cols else "arbitrary")
            kernel = _gcn_kernel_adj_once
        else:
            grid = (n_col_blocks, n_row_blocks)
            in_specs = [
                x_spec(lambda j, i: (0, 0)),
                pl.BlockSpec((in_f, tn), lambda j, i: (0, j)),
                pl.BlockSpec((tm, n_pad), lambda j, i: (i, 0)),
                pl.BlockSpec((1, tn), lambda j, i: (0, j)),
            ]
            out_spec = pl.BlockSpec((tm, tn), lambda j, i: (i, j))
            scratch = [pltpu.VMEM((n_pad, tn), compute_dtype)]
            dims = ("parallel", "arbitrary")
            kernel = _gcn_kernel_col_outer

        return pl.pallas_call(
            kernel,
            out_shape=jax.ShapeDtypeStruct((n_pad, f_pad), out_dtype),
            grid_spec=pltpu.PrefetchScalarGridSpec(
                num_scalar_prefetch=0,
                grid=grid,
                in_specs=in_specs,
                out_specs=out_spec,
                scratch_shapes=scratch,
            ),
            compiler_params=pltpu.CompilerParams(
                dimension_semantics=dims,
                vmem_limit_bytes=vmem_limit,
            ),
            cost_estimate=cost,
        )

    # Optimistic config (single-buffered x + megacore-parallel column axis);
    # fall back to the conservative, previously-validated config if this
    # JAX/Mosaic version rejects either feature.
    try:
        out = _build(single_buffer_x=True, parallel_cols=True)(
            x, weight, adj, bias2d)
    except Exception:
        out = _build(single_buffer_x=False, parallel_cols=False)(
            x, weight, adj, bias2d)

    return out[:N, :out_f]


# ---------------- deterministic setup + checks ----------------

def init_params(key, in_features, out_features):
    # Mirrors the PyTorch init: uniform(-stdv, stdv), stdv = 1/sqrt(out_features)
    std_v = 1.0 / math.sqrt(out_features)
    kw, kb = jax.random.split(key)
    weight = jax.random.uniform(kw, (in_features, out_features),
                                jnp.float32, -std_v, std_v)
    bias = jax.random.uniform(kb, (out_features,), jnp.float32, -std_v, std_v)
    return weight, bias


def _make_graph(key, n, in_features, density=0.05):
    kx, kadj = jax.random.split(key)
    x = jax.random.normal(kx, (n, in_features), dtype=jnp.float32)
    a = (jax.random.uniform(kadj, (n, n)) < density).astype(jnp.float32)
    a = jnp.maximum(a, a.T) + jnp.eye(n, dtype=jnp.float32)
    adj = a / jnp.sum(a, axis=1, keepdims=True)     # row-normalized
    return x, adj


def _ref_f32(x, adj, w, b):
    return adj @ (x @ w) + b


def _ref_bf16(x, adj, w, b):
    # Emulates the kernel's bf16-input / f32-accumulate numerics.
    xb = x.astype(jnp.bfloat16)
    ab = adj.astype(jnp.bfloat16)
    wb = w.astype(jnp.bfloat16)
    support = jnp.dot(xb, wb, preferred_element_type=jnp.float32
                      ).astype(jnp.bfloat16)
    return jnp.dot(ab, support, preferred_element_type=jnp.float32) + b


if __name__ == "__main__":
    key = jax.random.PRNGKey(0)
    k1, k2, kp1, kp2 = jax.random.split(key, 4)

    # --- check 1: default bf16 MXU path, aligned shapes, adj streamed once ---
    N, in_features, out_features = 256, 128, 256
    x, adj = _make_graph(k1, N, in_features)
    weight, bias = init_params(kp1, in_features, out_features)

    out = jax.block_until_ready(graph_convolution(x, adj, weight, bias))
    assert out.shape == (N, out_features)
    ref_bf16 = _ref_bf16(x, adj, weight, bias)
    assert jnp.allclose(out, ref_bf16, atol=5e-3, rtol=5e-3), \
        "mismatch (bf16 row_outer)"

    # --- check 2: f32 path, forced column-outer fallback layout ---
    out2 = jax.block_until_ready(
        graph_convolution(x, adj, weight, bias,
                          use_bf16_inputs=False, layout="col_outer"))
    assert jnp.allclose(out2, _ref_f32(x, adj, weight, bias),
                        atol=1e-4, rtol=1e-4), "mismatch (f32 col_outer)"

    # --- check 3: non-tile-aligned shapes (padding path), f32, auto layout ---
    N3, in3, out3 = 200, 96, 72
    x3, adj3 = _make_graph(k2, N3, in3)
    w3, b3 = init_params(kp2, in3, out3)
    out3_ = jax.block_until_ready(
        graph_convolution(x3, adj3, w3, b3, use_bf16_inputs=False))
    assert out3_.shape == (N3, out3)
    assert jnp.allclose(out3_, _ref_f32(x3, adj3, w3, b3),
                        atol=1e-4, rtol=1e-4), "mismatch (padded)"

    print("KERNEL_OK")
</pallas_src>

<mosaic_0001>
module attributes {stable_mosaic.version = 11 : i64} {
  func.func @_gcn_kernel_adj_once(%arg0: i32, %arg1: i32, %arg2: memref<256x128xbf16, #tpu.memory_space<vmem>>, %arg3: memref<128x128xbf16, #tpu.memory_space<vmem>>, %arg4: memref<256x256xbf16, #tpu.memory_space<vmem>>, %arg5: memref<1x128xf32, #tpu.memory_space<vmem>>, %arg6: memref<256x128xf32, #tpu.memory_space<vmem>>, %arg7: memref<256x256xbf16, #tpu.memory_space<vmem>>) attributes {dimension_semantics = [#tpu.dimension_semantics<arbitrary>, #tpu.dimension_semantics<parallel>], iteration_bounds = array<i64: 1, 2>, scalar_prefetch = 0 : i64, scratch_operands = 1 : i64, tpu.core_type = #tpu.core_type<tc>, window_params = [{pipeline_mode = #tpu.pipeline_mode<synchronous>, transform_indices = @transform_0, window_bounds = array<i64: 256, 128>}, {transform_indices = @transform_1, window_bounds = array<i64: 128, 128>}, {transform_indices = @transform_2, window_bounds = array<i64: 256, 256>}, {transform_indices = @transform_3, window_bounds = array<i64: 1, 128>}, {transform_indices = @transform_4, window_bounds = array<i64: 256, 128>}]} {
    %c128_i32 = arith.constant 128 : i32
    %0 = arith.muli %arg1, %c128_i32 : i32
    %1 = tpu.assume_multiple %0, 128 : i32
    %c0_i32 = arith.constant 0 : i32
    %2 = arith.cmpi eq, %arg0, %c0_i32 : i32
    %3 = arith.extui %2 : i1 to i32
    %c0_i32_0 = arith.constant 0 : i32
    %4 = arith.cmpi ne, %3, %c0_i32_0 : i32
    scf.if %4 {
      %c0_7 = arith.constant 0 : index
      %c0_8 = arith.constant 0 : index
      %13 = vector.load %arg2[%c0_7, %c0_8] : memref<256x128xbf16, #tpu.memory_space<vmem>>, vector<256x128xbf16>
      %c0_9 = arith.constant 0 : index
      %c0_10 = arith.constant 0 : index
      %14 = vector.load %arg3[%c0_9, %c0_10] : memref<128x128xbf16, #tpu.memory_space<vmem>>, vector<128x128xbf16>
      %cst_11 = arith.constant dense<0.000000e+00> : vector<256x128xf32>
      %15 = tpu.matmul %13, %14, %cst_11 {dimension_numbers = #tpu.dot_dimension_numbers<[1], [0], [0], [1], [0, 0, 1, 1], [], []>} : vector<256x128xbf16>, vector<128x128xbf16>, vector<256x128xf32> -> vector<256x128xf32>
      %16 = arith.truncf %15 : vector<256x128xf32> to vector<256x128xbf16>
      %c0_12 = arith.constant 0 : index
      %17 = arith.index_cast %1 : i32 to index
      %18 = vector.load %arg7[%c0_12, %17] : memref<256x256xbf16, #tpu.memory_space<vmem>>, vector<256x128xbf16>
      tpu.vector_store %arg7[%c0_12, %17], %16 {strides = array<i32>} : memref<256x256xbf16, #tpu.memory_space<vmem>>, vector<256x128xbf16>,
    } else {
    }
    %c0 = arith.constant 0 : index
    %c0_1 = arith.constant 0 : index
    %5 = vector.load %arg4[%c0, %c0_1] : memref<256x256xbf16, #tpu.memory_space<vmem>>, vector<256x256xbf16>
    %c0_2 = arith.constant 0 : index
    %6 = arith.index_cast %1 : i32 to index
    %7 = vector.load %arg7[%c0_2, %6] : memref<256x256xbf16, #tpu.memory_space<vmem>>, vector<256x128xbf16>
    %cst = arith.constant dense<0.000000e+00> : vector<256x128xf32>
    %8 = tpu.matmul %5, %7, %cst {dimension_numbers = #tpu.dot_dimension_numbers<[1], [0], [0], [1], [0, 0, 1, 1], [], []>} : vector<256x256xbf16>, vector<256x128xbf16>, vector<256x128xf32> -> vector<256x128xf32>
    %c0_3 = arith.constant 0 : index
    %c0_4 = arith.constant 0 : index
    %9 = vector.load %arg5[%c0_3, %c0_4] : memref<1x128xf32, #tpu.memory_space<vmem>>, vector<1x128xf32>
    %10 = vector.broadcast %9 : vector<1x128xf32> to vector<256x128xf32>
    %11 = arith.addf %8, %10 : vector<256x128xf32>
    %c0_5 = arith.constant 0 : index
    %c0_6 = arith.constant 0 : index
    %12 = vector.load %arg6[%c0_5, %c0_6] : memref<256x128xf32, #tpu.memory_space<vmem>>, vector<256x128xf32>
    tpu.vector_store %arg6[%c0_5, %c0_6], %11 {strides = array<i32>} : memref<256x128xf32, #tpu.memory_space<vmem>>, vector<256x128xf32>,
    return
  }
  func.func @transform_0(%arg0: i32, %arg1: i32) -> (i32, i32) {
    %c0_i32 = arith.constant 0 : i32
    %c0_i32_0 = arith.constant 0 : i32
    %c0_i32_1 = arith.constant 0 : i32
    return %c0_i32, %c0_i32_0 : i32, i32
  }
  func.func @transform_1(%arg0: i32, %arg1: i32) -> (i32, i32) {
    %c0_i32 = arith.constant 0 : i32
    %c0_i32_0 = arith.constant 0 : i32
    return %c0_i32, %arg1 : i32, i32
  }
  func.func @transform_2(%arg0: i32, %arg1: i32) -> (i32, i32) {
    %c0_i32 = arith.constant 0 : i32
    %c0_i32_0 = arith.constant 0 : i32
    return %arg0, %c0_i32 : i32, i32
  }
  func.func @transform_3(%arg0: i32, %arg1: i32) -> (i32, i32) {
    %c0_i32 = arith.constant 0 : i32
    %c0_i32_0 = arith.constant 0 : i32
    return %c0_i32, %arg1 : i32, i32
  }
  func.func @transform_4(%arg0: i32, %arg1: i32) -> (i32, i32) {
    %c0_i32 = arith.constant 0 : i32
    return %arg0, %arg1 : i32, i32
  }
}

module attributes {stable_mosaic.version = 11 : i64} {
  func.func @_gcn_kernel_adj_once(%arg0: i32, %arg1: i32, %arg2: memref<256x128xbf16, #tpu.memory_space<vmem>>, %arg3: memref<128x128xbf16, #tpu.memory_space<vmem>>, %arg4: memref<256x256xbf16, #tpu.memory_space<vmem>>, %arg5: memref<1x128xf32, #tpu.memory_space<vmem>>, %arg6: memref<256x128xf32, #tpu.memory_space<vmem>>, %arg7: memref<256x256xbf16, #tpu.memory_space<vmem>>) attributes {dimension_semantics = [#tpu.dimension_semantics<arbitrary>, #tpu.dimension_semantics<arbitrary>], iteration_bounds = array<i64: 1, 2>, scalar_prefetch = 0 : i64, scratch_operands = 1 : i64, tpu.core_type = #tpu.core_type<tc>, window_params = [{pipeline_mode = #tpu.pipeline_mode<synchronous>, transform_indices = @transform_0, window_bounds = array<i64: 256, 128>}, {transform_indices = @transform_1, window_bounds = array<i64: 128, 128>}, {transform_indices = @transform_2, window_bounds = array<i64: 256, 256>}, {transform_indices = @transform_3, window_bounds = array<i64: 1, 128>}, {transform_indices = @transform_4, window_bounds = array<i64: 256, 128>}]} {
    %c128_i32 = arith.constant 128 : i32
    %0 = arith.muli %arg1, %c128_i32 : i32
    %1 = tpu.assume_multiple %0, 128 : i32
    %c0_i32 = arith.constant 0 : i32
    %2 = arith.cmpi eq, %arg0, %c0_i32 : i32
    %3 = arith.extui %2 : i1 to i32
    %c0_i32_0 = arith.constant 0 : i32
    %4 = arith.cmpi ne, %3, %c0_i32_0 : i32
    scf.if %4 {
      %c0_7 = arith.constant 0 : index
      %c0_8 = arith.constant 0 : index
      %13 = vector.load %arg2[%c0_7, %c0_8] : memref<256x128xbf16, #tpu.memory_space<vmem>>, vector<256x128xbf16>
      %c0_9 = arith.constant 0 : index
      %c0_10 = arith.constant 0 : index
      %14 = vector.load %arg3[%c0_9, %c0_10] : memref<128x128xbf16, #tpu.memory_space<vmem>>, vector<128x128xbf16>
      %cst_11 = arith.constant dense<0.000000e+00> : vector<256x128xf32>
      %15 = tpu.matmul %13, %14, %cst_11 {dimension_numbers = #tpu.dot_dimension_numbers<[1], [0], [0], [1], [0, 0, 1, 1], [], []>} : vector<256x128xbf16>, vector<128x128xbf16>, vector<256x128xf32> -> vector<256x128xf32>
      %16 = arith.truncf %15 : vector<256x128xf32> to vector<256x128xbf16>
      %c0_12 = arith.constant 0 : index
      %17 = arith.index_cast %1 : i32 to index
      %18 = vector.load %arg7[%c0_12, %17] : memref<256x256xbf16, #tpu.memory_space<vmem>>, vector<256x128xbf16>
      tpu.vector_store %arg7[%c0_12, %17], %16 {strides = array<i32>} : memref<256x256xbf16, #tpu.memory_space<vmem>>, vector<256x128xbf16>,
    } else {
    }
    %c0 = arith.constant 0 : index
    %c0_1 = arith.constant 0 : index
    %5 = vector.load %arg4[%c0, %c0_1] : memref<256x256xbf16, #tpu.memory_space<vmem>>, vector<256x256xbf16>
    %c0_2 = arith.constant 0 : index
    %6 = arith.index_cast %1 : i32 to index
    %7 = vector.load %arg7[%c0_2, %6] : memref<256x256xbf16, #tpu.memory_space<vmem>>, vector<256x128xbf16>
    %cst = arith.constant dense<0.000000e+00> : vector<256x128xf32>
    %8 = tpu.matmul %5, %7, %cst {dimension_numbers = #tpu.dot_dimension_numbers<[1], [0], [0], [1], [0, 0, 1, 1], [], []>} : vector<256x256xbf16>, vector<256x128xbf16>, vector<256x128xf32> -> vector<256x128xf32>
    %c0_3 = arith.constant 0 : index
    %c0_4 = arith.constant 0 : index
    %9 = vector.load %arg5[%c0_3, %c0_4] : memref<1x128xf32, #tpu.memory_space<vmem>>, vector<1x128xf32>
    %10 = vector.broadcast %9 : vector<1x128xf32> to vector<256x128xf32>
    %11 = arith.addf %8, %10 : vector<256x128xf32>
    %c0_5 = arith.constant 0 : index
    %c0_6 = arith.constant 0 : index
    %12 = vector.load %arg6[%c0_5, %c0_6] : memref<256x128xf32, #tpu.memory_space<vmem>>, vector<256x128xf32>
    tpu.vector_store %arg6[%c0_5, %c0_6], %11 {strides = array<i32>} : memref<256x128xf32, #tpu.memory_space<vmem>>, vector<256x128xf32>,
    return
  }
  func.func @transform_0(%arg0: i32, %arg1: i32) -> (i32, i32) {
    %c0_i32 = arith.constant 0 : i32
    %c0_i32_0 = arith.constant 0 : i32
    %c0_i32_1 = arith.constant 0 : i32
    return %c0_i32, %c0_i32_0 : i32, i32
  }
  func.func @transform_1(%arg0: i32, %arg1: i32) -> (i32, i32) {
    %c0_i32 = arith.constant 0 : i32
    %c0_i32_0 = arith.constant 0 : i32
    return %c0_i32, %arg1 : i32, i32
  }
  func.func @transform_2(%arg0: i32, %arg1: i32) -> (i32, i32) {
    %c0_i32 = arith.constant 0 : i32
    %c0_i32_0 = arith.constant 0 : i32
    return %arg0, %c0_i32 : i32, i32
  }
  func.func @transform_3(%arg0: i32, %arg1: i32) -> (i32, i32) {
    %c0_i32 = arith.constant 0 : i32
    %c0_i32_0 = arith.constant 0 : i32
    return %c0_i32, %arg1 : i32, i32
  }
  func.func @transform_4(%arg0: i32, %arg1: i32) -> (i32, i32) {
    %c0_i32 = arith.constant 0 : i32
    return %arg0, %arg1 : i32, i32
  }
}

</mosaic_0001>

<llo_original>
// kernel: tpu_custom_call.1
$region0: #{tpu_custom_call.1}
  #allocation0 [shape = 'u32[]', space=smem, size = 0x4, offset = 0x4, fixed_abs, tag = 'smem constant byte address 0x4 - core index']
  #allocation1 [shape = 'u32[72,128]{1,0:T(1,128)}', space=vmem, size = 0x9000, scoped, tag = 'internal scratch']
  #allocation2 [shape = 'bf16[256,256]{1,0:T(8,128)(2,1)}', space=vmem, size = 0x20000, scoped, tag = 'scratch operand']
  %s0 = inlined_call_operand.hbm [shape: bf16[256,128], index: 0, kind: input, shape index: {}]
  %s1 = inlined_call_operand.hbm [shape: bf16[128,256], index: 1, kind: input, shape index: {}]
  %s2 = inlined_call_operand.hbm [shape: bf16[256,256], index: 2, kind: input, shape index: {}]
  %s3 = inlined_call_operand.vmem [shape: f32[1,256], index: 3, kind: input, shape index: {}]
  %s4 = inlined_call_operand.hbm [shape: f32[256,256], index: 4, kind: output, shape index: {}]
  %s5 = sld [smem:[#allocation0]]
  $region65: #{tpu_custom_call.1} parent=0
    _
  %s7 = ssub.s32 1, %s5
  %s8 = scalar_select 0, %s7, %s5
  $region1: #{tpu_custom_call.1} parent=0
    #allocation3 [shape = 'u8[65536]{0}', space=vmem, size = 0x10000, scoped, tag = 'input window, operand 0, single buffered']
    #allocation4 [shape = 's32[2]{0}', space=sflag, size = 0x8, scoped, tag = 'scoped memory for tpu_custom_call.1']
    #allocation5 [shape = 's32[2]{0}', space=sflag, size = 0x8, scoped, tag = 'scoped memory for tpu_custom_call.1']
    #allocation6 [shape = 'u8[65536]{0}', space=vmem, size = 0x10000, scoped, tag = 'input window, operand 1']
    #allocation7 [shape = 's32[2]{0}', space=sflag, size = 0x8, scoped, tag = 'scoped memory for tpu_custom_call.1']
    #allocation8 [shape = 'u8[131072]{0}', space=vmem, size = 0x20000, scoped, tag = 'input window, operand 2, single buffered']
    #allocation9 [shape = 'u8[262144]{0}', space=vmem, size = 0x40000, scoped, tag = 'output window, operand 0']
    %9 = vsyncpa [#allocation4], 0
    %10 = vsyncpa [#allocation7], 0
    %s11 = scalar_lea.sflag [#allocation7], 1
    %12 = vsyncpa %s11, 0
    %13 = vsyncpa [#allocation5], 0
    %s14 = scalar_lea.sflag [#allocation5], 1
    %15 = vsyncpa %s14, 0
    loop: start=0, step=1, limit=4
    $region2: #{tpu_custom_call.1} parent=1 // loop_pre_header
      _
    $region3: #{tpu_custom_call.1} parent=1 // loop_header
      %s17 = sphi 0, %s21
      %p18 = scmp.ge.s32.totalorder %s17, 4
      %s24 = sphi 0, %s36
      %s25 = sphi 0, %s32
      %s26 = sphi 0, %s24
      %s27 = sphi 0, %s25
      %s28 = sphi 0, %s26
      %s29 = sphi 0, %s27
      %s37 = sphi 0, %s37
      %s39 = sphi 0, %s37
      %s40 = sphi 0, %s39
      %s54 = sphi 0, %s40
      %s60 = sphi 0, %s62
      %s63 = sphi 0, %s60
      %s64 = sphi 0, %s63
      %s80 = sphi 0, %s64
      %s86 = sphi 0, %s88
      %s89 = sphi 0, %s86
      %s90 = sphi 0, %s89
      %s106 = sphi 0, %s90
      %s112 = sphi 0, %s114
      %s115 = sphi 0, %s112
      %s116 = sphi 0, %s115
      %s132 = sphi 0, %s116
      %s140 = sphi 0, %s142
      %s143 = sphi 0, %s140
      %s144 = sphi 0, %s143
      %s160 = sphi 0, %s144
    $region4: #{tpu_custom_call.1} parent=1 // loop_header_branch
      %20 = sbr.rel (%p18) target = $region8
    $region5: #{tpu_custom_call.1} parent=1 // loop_body
      %s22 = ssub.s32 %s17, 1
      %s23 = ssub.s32 %s17, 2
      %s30 = sadd.s32 1, %s25
      %p31 = scmp.ge.s32.totalorder %s30, 2
      %s32 = scalar_select %p31, 0, %s30
      %s33 = sadd.s32 1, %s24
      %s34 = scalar_select %p31, %s33, %s24
      %p35 = scmp.ge.s32.totalorder %s34, 1
      %s36 = scalar_select %p35, 0, %s34
      %s38 = sadd.s32 %s37, 1
      %p41 = scmp.eq.s32.totalorder %s17, 1
      %p42 = scmp.ne.s32.totalorder %s37, %s39
      %p43 = scmp.eq.s32.totalorder %s17, 0
      %p44 = por %p42, %p43
      %p45 = scmp.ne.s32.totalorder %s37, %s39
      %p46 = scmp.eq.s32.totalorder %s22, 1
      %p47 = por %p45, %p46
      %p48 = scmp.ne.s32.totalorder %s39, %s40
      %p49 = scmp.eq.s32.totalorder %s22, 0
      %p50 = por %p48, %p49
      %p51 = scmp.ne.s32.totalorder %s39, %s40
      %p52 = scmp.eq.s32.totalorder %s23, 1
      %p53 = por %p51, %p52
      %p55 = scmp.ne.s32.totalorder %s40, %s54
      %p56 = scmp.eq.s32.totalorder %s23, 0
      %p57 = por %p55, %p56
      %s58 = ssub.s32 %s25, %s32
      %p59 = scmp.eq.s32.totalorder %s58, 0
      %s61 = sadd.s32 %s60, 1
      %s62 = scalar_select %p59, %s60, %s61
      %p65 = pneg %p59
      %p66 = scmp.eq.s32.totalorder %s17, 1
      %p67 = por %p65, %p66
      %p68 = scmp.ne.s32.totalorder %s60, %s63
      %p69 = scmp.eq.s32.totalorder %s17, 0
      %p70 = por %p68, %p69
      %p71 = scmp.ne.s32.totalorder %s60, %s63
      %p72 = scmp.eq.s32.totalorder %s22, 1
      %p73 = por %p71, %p72
      %p74 = scmp.ne.s32.totalorder %s63, %s64
      %p75 = scmp.eq.s32.totalorder %s22, 0
      %p76 = por %p74, %p75
      %p77 = scmp.ne.s32.totalorder %s63, %s64
      %p78 = scmp.eq.s32.totalorder %s23, 1
      %p79 = por %p77, %p78
      %p81 = scmp.ne.s32.totalorder %s64, %s80
      %p82 = scmp.eq.s32.totalorder %s23, 0
      %p83 = por %p81, %p82
      %s84 = ssub.s32 %s24, %s36
      %p85 = scmp.eq.s32.totalorder %s84, 0
      %s87 = sadd.s32 %s86, 1
      %s88 = scalar_select %p85, %s86, %s87
      %p91 = pneg %p85
      %p92 = scmp.eq.s32.totalorder %s17, 1
      %p93 = por %p91, %p92
      %p94 = scmp.ne.s32.totalorder %s86, %s89
      %p95 = scmp.eq.s32.totalorder %s17, 0
      %p96 = por %p94, %p95
      %p97 = scmp.ne.s32.totalorder %s86, %s89
      %p98 = scmp.eq.s32.totalorder %s22, 1
      %p99 = por %p97, %p98
      %p100 = scmp.ne.s32.totalorder %s89, %s90
      %p101 = scmp.eq.s32.totalorder %s22, 0
      %p102 = por %p100, %p101
      %p103 = scmp.ne.s32.totalorder %s89, %s90
      %p104 = scmp.eq.s32.totalorder %s23, 1
      %p105 = por %p103, %p104
      %p107 = scmp.ne.s32.totalorder %s90, %s106
      %p108 = scmp.eq.s32.totalorder %s23, 0
      %p109 = por %p107, %p108
      %s110 = ssub.s32 %s25, %s32
      %p111 = scmp.eq.s32.totalorder %s110, 0
      %s113 = sadd.s32 %s112, 1
      %s114 = scalar_select %p111, %s112, %s113
      %p117 = pneg %p111
      %p118 = scmp.eq.s32.totalorder %s17, 1
      %p119 = por %p117, %p118
      %p120 = scmp.ne.s32.totalorder %s112, %s115
      %p121 = scmp.eq.s32.totalorder %s17, 0
      %p122 = por %p120, %p121
      %p123 = scmp.ne.s32.totalorder %s112, %s115
      %p124 = scmp.eq.s32.totalorder %s22, 1
      %p125 = por %p123, %p124
      %p126 = scmp.ne.s32.totalorder %s115, %s116
      %p127 = scmp.eq.s32.totalorder %s22, 0
      %p128 = por %p126, %p127
      %p129 = scmp.ne.s32.totalorder %s115, %s116
      %p130 = scmp.eq.s32.totalorder %s23, 1
      %p131 = por %p129, %p130
      %p133 = scmp.ne.s32.totalorder %s116, %s132
      %p134 = scmp.eq.s32.totalorder %s23, 0
      %p135 = por %p133, %p134
      %s136 = ssub.s32 %s24, %s36
      %s137 = ssub.s32 %s25, %s32
      %s138 = sor.u32 %s136, %s137
      %p139 = scmp.eq.s32.totalorder %s138, 0
      %s141 = sadd.s32 %s140, 1
      %s142 = scalar_select %p139, %s140, %s141
      %p145 = pneg %p139
      %p146 = scmp.eq.s32.totalorder %s17, 1
      %p147 = por %p145, %p146
      %p148 = scmp.ne.s32.totalorder %s140, %s143
      %p149 = scmp.eq.s32.totalorder %s17, 0
      %p150 = por %p148, %p149
      %p151 = scmp.ne.s32.totalorder %s140, %s143
      %p152 = scmp.eq.s32.totalorder %s22, 1
      %p153 = por %p151, %p152
      %p154 = scmp.ne.s32.totalorder %s143, %s144
      %p155 = scmp.eq.s32.totalorder %s22, 0
      %p156 = por %p154, %p155
      %p157 = scmp.ne.s32.totalorder %s143, %s144
      %p158 = scmp.eq.s32.totalorder %s23, 1
      %p159 = por %p157, %p158
      %p161 = scmp.ne.s32.totalorder %s144, %s160
      %p162 = scmp.eq.s32.totalorder %s23, 0
      %p163 = por %p161, %p162
      %p164 = scmp.le.s32.totalorder 1, %s17
      %p165 = scmp.lt.s32.totalorder %s17, 3
      %p166 = pnand %p164, %p165
      %p167 = pneg %p166
      // Predicated region
      $region9: #{tpu_custom_call.1} parent=5 // pred_check
        _
      $region10: #{tpu_custom_call.1} parent=5 // pred_check_branch
        %169 = sbr.rel (%p166) target = $region12
      $region11: #{tpu_custom_call.1} parent=5 // pred_region
        %s170 = ssub.s32 %s17, 1
        // Predicated region
        $region13: #{tpu_custom_call.1} parent=11 // pred_check
          %p171 = pneg %p50
        $region14: #{tpu_custom_call.1} parent=11 // pred_check_branch
          %173 = sbr.rel (%p171) target = $region16
        $region15: #{tpu_custom_call.1} parent=11 // pred_region
          %175 = vsyncadd [#allocation4], 0
          %s176 = sshll.u32 %s0, 4
          %s177 = int_to_ptr.hbm [resolvable:$true] %s176
          %s178 = sshll.u32 [#allocation3], 4
          %s179 = int_to_ptr.vmem [resolvable:$true] %s178
          %184 = dma.hbm_to_vmem [thread:$0]  %s177, 2048, %s179, [#allocation4], 64, 64, 4
        $region16: #{tpu_custom_call.1} parent=11 // pred_fallthru
          _
        // Predicated region
        $region17: #{tpu_custom_call.1} parent=11 // pred_check
          %p185 = pneg %p102
        $region18: #{tpu_custom_call.1} parent=11 // pred_check_branch
          %187 = sbr.rel (%p185) target = $region20
        $region19: #{tpu_custom_call.1} parent=11 // pred_region
          %s188 = smul.u32 32, %s26
          %190 = vsyncadd [#allocation7], 0
          %s191 = smul.addr %s188, 2
          %s192 = smul.addr %s191, 4
          %s193 = scalar_lea.hbm %s2, %s192
          %s194 = sshll.u32 %s193, 4
          %s195 = int_to_ptr.hbm [resolvable:$true] %s194
          %s196 = sshll.u32 [#allocation8], 4
          %s197 = int_to_ptr.vmem [resolvable:$true] %s196
          %202 = dma.hbm_to_vmem [thread:$0]  %s195, 4096, %s197, [#allocation7], 128, 128, 8
        $region20: #{tpu_custom_call.1} parent=11 // pred_fallthru
          _
      $region12: #{tpu_custom_call.1} parent=5 // pred_fallthru
        _
      %p203 = scmp.lt.s32.totalorder %s17, 2
      // Predicated region
      $region21: #{tpu_custom_call.1} parent=5 // pred_check
        %p204 = pneg %p203
      $region22: #{tpu_custom_call.1} parent=5 // pred_check_branch
        %206 = sbr.rel (%p204) target = $region24
      $region23: #{tpu_custom_call.1} parent=5 // pred_region
        // Predicated region
        $region25: #{tpu_custom_call.1} parent=23 // pred_check
          %p207 = pneg %p70
        $region26: #{tpu_custom_call.1} parent=23 // pred_check_branch
          %209 = sbr.rel (%p207) target = $region28
        $region27: #{tpu_custom_call.1} parent=23 // pred_region
          %s210 = sand.u32 %s17, 1
          %s211 = scalar_lea.sflag [#allocation7], %s210
          %s212 = sand.u32 %s60, 1
          %s213 = smul.addr %s212, 64
          %s214 = scalar_lea.vmem [#allocation6], %s213
          %216 = vsyncadd %s211, 0
          %s217 = smul.addr %s25, 4
          %s218 = scalar_lea.hbm %s1, %s217
          %s219 = sshll.u32 %s218, 4
          %s220 = int_to_ptr.hbm [resolvable:$true] %s219
          %s221 = sshll.u32 %s214, 4
          %s222 = int_to_ptr.vmem [resolvable:$true] %s221
          %227 = dma.hbm_to_vmem [thread:$0]  %s220, 1024, %s222, %s211, 128, 64, 4
        $region28: #{tpu_custom_call.1} parent=23 // pred_fallthru
          _
        // Predicated region
        $region29: #{tpu_custom_call.1} parent=23 // pred_check
          %p228 = pneg %p122
        $region30: #{tpu_custom_call.1} parent=23 // pred_check_branch
          %230 = sbr.rel (%p228) target = $region32
        $region31: #{tpu_custom_call.1} parent=23 // pred_region
          %p231 = scmp.lt.s32.totalorder %s25, 1
          %s232 = scalar_select %p231, %s25, 1
          %s233 = scalar_lea.vmem %s3, %s232
        $region32: #{tpu_custom_call.1} parent=23 // pred_fallthru
          _
      $region24: #{tpu_custom_call.1} parent=5 // pred_fallthru
        _
      %p234 = scmp.le.s32.totalorder 1, %s17
      %p235 = scmp.lt.s32.totalorder %s17, 3
      %p236 = pnand %p234, %p235
      %p237 = pneg %p236
      // Predicated region
      $region33: #{tpu_custom_call.1} parent=5 // pred_check
        _
      $region34: #{tpu_custom_call.1} parent=5 // pred_check_branch
        %239 = sbr.rel (%p236) target = $region36
      $region35: #{tpu_custom_call.1} parent=5 // pred_region
        %s240 = ssub.s32 %s17, 1
        // Predicated region
        $region37: #{tpu_custom_call.1} parent=35 // pred_check
          %p241 = pneg %p50
        $region38: #{tpu_custom_call.1} parent=35 // pred_check_branch
          %243 = sbr.rel (%p241) target = $region40
        $region39: #{tpu_custom_call.1} parent=35 // pred_region
          %245 = dma.done [#allocation4], 2048
        $region40: #{tpu_custom_call.1} parent=35 // pred_fallthru
          _
        %s246 = sand.u32 %s22, 1
        %s247 = scalar_lea.sflag [#allocation7], %s246
        %s248 = sand.u32 %s63, 1
        %s249 = smul.addr %s248, 64
        %s250 = scalar_lea.vmem [#allocation6], %s249
        // Predicated region
        $region41: #{tpu_custom_call.1} parent=35 // pred_check
          %p251 = pneg %p76
        $region42: #{tpu_custom_call.1} parent=35 // pred_check_branch
          %253 = sbr.rel (%p251) target = $region44
        $region43: #{tpu_custom_call.1} parent=35 // pred_region
          %255 = dma.done %s247, 1024
        $region44: #{tpu_custom_call.1} parent=35 // pred_fallthru
          _
        // Predicated region
        $region45: #{tpu_custom_call.1} parent=35 // pred_check
          %p256 = pneg %p102
        $region46: #{tpu_custom_call.1} parent=35 // pred_check_branch
          %258 = sbr.rel (%p256) target = $region48
        $region47: #{tpu_custom_call.1} parent=35 // pred_region
          %260 = dma.done [#allocation7], 4096
        $region48: #{tpu_custom_call.1} parent=35 // pred_fallthru
          _
        %p261 = pneg %p50
        %p262 = pneg %p47
        %s263 = sand.u32 %s22, 1
        %s264 = scalar_lea.sflag [#allocation7], %s263
        %s265 = sand.u32 %s63, 1
        %s266 = smul.addr %s265, 64
        %s267 = scalar_lea.vmem [#allocation6], %s266
        %p268 = pneg %p76
        %p269 = pneg %p73
        %p270 = pneg %p102
        %p271 = pneg %p99
        %p272 = scmp.lt.s32.totalorder %s27, 1
        %s273 = scalar_select %p272, %s27, 1
        %s274 = scalar_lea.vmem %s3, %s273
        %p275 = pneg %p128
        %p276 = pneg %p125
        %p277 = pneg %p156
        %p278 = pneg %p153
        %s279 = sand.u32 %s143, 1
        %s280 = scalar_lea.sflag [#allocation5], %s279
        %s281 = sand.u32 %s143, 1
        %s282 = smul.addr %s281, 256
        %s283 = scalar_lea.vmem [#allocation9], %s282
        %s284 = smul.u32 32, %s26
        %p285 = scmp.lt.s32.totalorder %s27, 1
        %s286 = scalar_select %p285, %s27, 1
        %s287 = scalar_lea.vmem %s3, %s286
        %s288 = smul.u32 32, %s26
        %s289 = smul.u32 %s27, 128
        %p290 = scmp.eq.s32.totalorder %s26, 0
        // Predicated region
        $region49: #{tpu_custom_call.1} parent=35 // pred_check
          %p291 = pneg %p290
        $region50: #{tpu_custom_call.1} parent=35 // pred_check_branch
          %293 = sbr.rel (%p291) target = $region52
        $region51: #{tpu_custom_call.1} parent=35 // pred_region
          %v294 = vld [vmem:[#allocation3] sm:$0xf]
          %v295 = vld [vmem:[#allocation3 + $0x4] sm:$0xf]
          %v296 = vld [vmem:[#allocation3 + $0x8] sm:$0xf]
          %v297 = vld [vmem:[#allocation3 + $0xc] sm:$0xf]
          %v298 = vld [vmem:[#allocation3 + $0x10] sm:$0xf]
          %v299 = vld [vmem:[#allocation3 + $0x14] sm:$0xf]
          %v300 = vld [vmem:[#allocation3 + $0x18] sm:$0xf]
          %v301 = vld [vmem:[#allocation3 + $0x1c] sm:$0xf]
          %v302 = vld [vmem:[#allocation3 + $0x20] sm:$0xf]
          %v303 = vld [vmem:[#allocation3 + $0x24] sm:$0xf]
          %v304 = vld [vmem:[#allocation3 + $0x28] sm:$0xf]
          %v305 = vld [vmem:[#allocation3 + $0x2c] sm:$0xf]
          %v306 = vld [vmem:[#allocation3 + $0x30] sm:$0xf]
          %v307 = vld [vmem:[#allocation3 + $0x34] sm:$0xf]
          %v308 = vld [vmem:[#allocation3 + $0x38] sm:$0xf]
          %v309 = vld [vmem:[#allocation3 + $0x3c] sm:$0xf]
          %v310 = vld [vmem:[#allocation3 + $0x40] sm:$0xf]
          %v311 = vld [vmem:[#allocation3 + $0x44] sm:$0xf]
          %v312 = vld [vmem:[#allocation3 + $0x48] sm:$0xf]
          %v313 = vld [vmem:[#allocation3 + $0x4c] sm:$0xf]
          %v314 = vld [vmem:[#allocation3 + $0x50] sm:$0xf]
          %v315 = vld [vmem:[#allocation3 + $0x54] sm:$0xf]
          %v316 = vld [vmem:[#allocation3 + $0x58] sm:$0xf]
          %v317 = vld [vmem:[#allocation3 + $0x5c] sm:$0xf]
          %v318 = vld [vmem:[#allocation3 + $0x60] sm:$0xf]
          %v319 = vld [vmem:[#allocation3 + $0x64] sm:$0xf]
          %v320 = vld [vmem:[#allocation3 + $0x68] sm:$0xf]
          %v321 = vld [vmem:[#allocation3 + $0x6c] sm:$0xf]
          %v322 = vld [vmem:[#allocation3 + $0x70] sm:$0xf]
          %v323 = vld [vmem:[#allocation3 + $0x74] sm:$0xf]
          %v324 = vld [vmem:[#allocation3 + $0x78] sm:$0xf]
          %v325 = vld [vmem:[#allocation3 + $0x7c] sm:$0xf]
          %v326 = vld [vmem:[%s250] sm:$0xf]
          %v327 = vld [vmem:[%s250 + $0x4] sm:$0xf]
          %v328 = vld [vmem:[%s250 + $0x8] sm:$0xf]
          %v329 = vld [vmem:[%s250 + $0xc] sm:$0xf]
          %v330 = vld [vmem:[%s250 + $0x10] sm:$0xf]
          %v331 = vld [vmem:[%s250 + $0x14] sm:$0xf]
          %v332 = vld [vmem:[%s250 + $0x18] sm:$0xf]
          %v333 = vld [vmem:[%s250 + $0x1c] sm:$0xf]
          %v334 = vld [vmem:[%s250 + $0x20] sm:$0xf]
          %v335 = vld [vmem:[%s250 + $0x24] sm:$0xf]
          %v336 = vld [vmem:[%s250 + $0x28] sm:$0xf]
          %v337 = vld [vmem:[%s250 + $0x2c] sm:$0xf]
          %v338 = vld [vmem:[%s250 + $0x30] sm:$0xf]
          %v339 = vld [vmem:[%s250 + $0x34] sm:$0xf]
          %v340 = vld [vmem:[%s250 + $0x38] sm:$0xf]
          %v341 = vld [vmem:[%s250 + $0x3c] sm:$0xf]
          %v374 = vunpack.c.l.b16 %v294
          %v375 = vunpack.c.l.b16 %v295
          %v376 = vunpack.c.l.b16 %v296
          %v377 = vunpack.c.l.b16 %v297
          %v378 = vunpack.c.l.b16 %v298
          %v379 = vunpack.c.l.b16 %v299
          %v380 = vunpack.c.l.b16 %v300
          %v381 = vunpack.c.l.b16 %v301
          %v382 = vunpack.c.l.b16 %v302
          %v383 = vunpack.c.l.b16 %v303
          %v384 = vunpack.c.l.b16 %v304
          %v385 = vunpack.c.l.b16 %v305
          %v386 = vunpack.c.l.b16 %v306
          %v387 = vunpack.c.l.b16 %v307
          %v388 = vunpack.c.l.b16 %v308
          %v389 = vunpack.c.l.b16 %v309
          %v390 = vunpack.c.l.b16 %v310
          %v391 = vunpack.c.l.b16 %v311
          %v392 = vunpack.c.l.b16 %v312
          %v393 = vunpack.c.l.b16 %v313
          %v394 = vunpack.c.l.b16 %v314
          %v395 = vunpack.c.l.b16 %v315
          %v396 = vunpack.c.l.b16 %v316
          %v397 = vunpack.c.l.b16 %v317
          %v398 = vunpack.c.l.b16 %v318
          %v399 = vunpack.c.l.b16 %v319
          %v400 = vunpack.c.l.b16 %v320
          %v401 = vunpack.c.l.b16 %v321
          %v402 = vunpack.c.l.b16 %v322
          %v403 = vunpack.c.l.b16 %v323
          %v404 = vunpack.c.l.b16 %v324
          %v405 = vunpack.c.l.b16 %v325
          %v406 = vpack.c.b16 %v375, %v374
          %v407 = vpack.c.b16 %v377, %v376
          %v408 = vpack.c.b16 %v379, %v378
          %v409 = vpack.c.b16 %v381, %v380
          %v410 = vpack.c.b16 %v383, %v382
          %v411 = vpack.c.b16 %v385, %v384
          %v412 = vpack.c.b16 %v387, %v386
          %v413 = vpack.c.b16 %v389, %v388
          %v414 = vpack.c.b16 %v391, %v390
          %v415 = vpack.c.b16 %v393, %v392
          %v416 = vpack.c.b16 %v395, %v394
          %v417 = vpack.c.b16 %v397, %v396
          %v418 = vpack.c.b16 %v399, %v398
          %v419 = vpack.c.b16 %v401, %v400
          %v420 = vpack.c.b16 %v403, %v402
          %v421 = vpack.c.b16 %v405, %v404
          %v454 = vunpack.c.l.b16 %v326
          %v455 = vunpack.c.l.b16 %v327
          %v456 = vunpack.c.l.b16 %v328
          %v457 = vunpack.c.l.b16 %v329
          %v458 = vunpack.c.l.b16 %v330
          %v459 = vunpack.c.l.b16 %v331
          %v460 = vunpack.c.l.b16 %v332
          %v461 = vunpack.c.l.b16 %v333
          %v462 = vunpack.c.l.b16 %v334
          %v463 = vunpack.c.l.b16 %v335
          %v464 = vunpack.c.l.b16 %v336
          %v465 = vunpack.c.l.b16 %v337
          %v466 = vunpack.c.l.b16 %v338
          %v467 = vunpack.c.l.b16 %v339
          %v468 = vunpack.c.l.b16 %v340
          %v469 = vunpack.c.l.b16 %v341
          %v470 = vpack.c.b16 %v455, %v454
          %v471 = vpack.c.b16 %v457, %v456
          %v472 = vpack.c.b16 %v459, %v458
          %v473 = vpack.c.b16 %v461, %v460
          %v474 = vpack.c.b16 %v463, %v462
          %v475 = vpack.c.b16 %v465, %v464
          %v476 = vpack.c.b16 %v467, %v466
          %v477 = vpack.c.b16 %v469, %v468
          %486 = vmatpush.bf16.msra.mxu0 %v477
          %487 = vmatpush.bf16.msra.mxu0 %v476
          %488 = vmatpush.bf16.msra.mxu0 %v475
          %489 = vmatpush.bf16.msra.mxu0 %v474
          %490 = vmatpush.bf16.msra.mxu0 %v473
          %491 = vmatpush.bf16.msra.mxu0 %v472
          %492 = vmatpush.bf16.msra.mxu0 %v471
          %493 = vmatpush.bf16.msra.mxu0 %v470
          %494 = vmatmul.bf16.gmra.mxu0 %v406
          %v495 = vpop.f32.mrf.mxu0
          %v496 = vadd.f32 0.0, %v495
          %v497 = vpop.f32.mrf.mxu0
          %v498 = vadd.f32 0.0, %v497
          %499 = vmatmul.bf16.gmra.mxu0 %v407
          %v500 = vpop.f32.mrf.mxu0
          %v501 = vadd.f32 0.0, %v500
          %v502 = vpop.f32.mrf.mxu0
          %v503 = vadd.f32 0.0, %v502
          %504 = vmatmul.bf16.gmra.mxu0 %v408
          %v505 = vpop.f32.mrf.mxu0
          %v506 = vadd.f32 0.0, %v505
          %v507 = vpop.f32.mrf.mxu0
          %v508 = vadd.f32 0.0, %v507
          %509 = vmatmul.bf16.gmra.mxu0 %v409
          %v510 = vpop.f32.mrf.mxu0
          %v511 = vadd.f32 0.0, %v510
          %v512 = vpop.f32.mrf.mxu0
          %v513 = vadd.f32 0.0, %v512
          %514 = vmatmul.bf16.gmra.mxu0 %v410
          %v515 = vpop.f32.mrf.mxu0
          %v516 = vadd.f32 0.0, %v515
          %v517 = vpop.f32.mrf.mxu0
          %v518 = vadd.f32 0.0, %v517
          %519 = vmatmul.bf16.gmra.mxu0 %v411
          %v520 = vpop.f32.mrf.mxu0
          %v521 = vadd.f32 0.0, %v520
          %v522 = vpop.f32.mrf.mxu0
          %v523 = vadd.f32 0.0, %v522
          %524 = vmatmul.bf16.gmra.mxu0 %v412
          %v525 = vpop.f32.mrf.mxu0
          %v526 = vadd.f32 0.0, %v525
          %v527 = vpop.f32.mrf.mxu0
          %v528 = vadd.f32 0.0, %v527
          %529 = vmatmul.bf16.gmra.mxu0 %v413
          %v530 = vpop.f32.mrf.mxu0
          %v531 = vadd.f32 0.0, %v530
          %v532 = vpop.f32.mrf.mxu0
          %v533 = vadd.f32 0.0, %v532
          %534 = vmatmul.bf16.gmra.mxu0 %v414
          %v535 = vpop.f32.mrf.mxu0
          %v536 = vadd.f32 0.0, %v535
          %v537 = vpop.f32.mrf.mxu0
          %v538 = vadd.f32 0.0, %v537
          %539 = vmatmul.bf16.gmra.mxu0 %v415
          %v540 = vpop.f32.mrf.mxu0
          %v541 = vadd.f32 0.0, %v540
          %v542 = vpop.f32.mrf.mxu0
          %v543 = vadd.f32 0.0, %v542
          %544 = vmatmul.bf16.gmra.mxu0 %v416
          %v545 = vpop.f32.mrf.mxu0
          %v546 = vadd.f32 0.0, %v545
          %v547 = vpop.f32.mrf.mxu0
          %v548 = vadd.f32 0.0, %v547
          %549 = vmatmul.bf16.gmra.mxu0 %v417
          %v550 = vpop.f32.mrf.mxu0
          %v551 = vadd.f32 0.0, %v550
          %v552 = vpop.f32.mrf.mxu0
          %v553 = vadd.f32 0.0, %v552
          %554 = vmatmul.bf16.gmra.mxu0 %v418
          %v555 = vpop.f32.mrf.mxu0
          %v556 = vadd.f32 0.0, %v555
          %v557 = vpop.f32.mrf.mxu0
          %v558 = vadd.f32 0.0, %v557
          %559 = vmatmul.bf16.gmra.mxu0 %v419
          %v560 = vpop.f32.mrf.mxu0
          %v561 = vadd.f32 0.0, %v560
          %v562 = vpop.f32.mrf.mxu0
          %v563 = vadd.f32 0.0, %v562
          %564 = vmatmul.bf16.gmra.mxu0 %v420
          %v565 = vpop.f32.mrf.mxu0
          %v566 = vadd.f32 0.0, %v565
          %v567 = vpop.f32.mrf.mxu0
          %v568 = vadd.f32 0.0, %v567
          %569 = vmatmul.bf16.gmra.mxu0 %v421
          %v570 = vpop.f32.mrf.mxu0
          %v571 = vadd.f32 0.0, %v570
          %v572 = vpop.f32.mrf.mxu0
          %v573 = vadd.f32 0.0, %v572
          %574 = vdwg.mxu0
          %v575 = vpack.c.bf16 %v496, %v496
          %v576 = vpack.c.bf16 %v498, %v498
          %v577 = vpack.c.bf16 %v501, %v501
          %v578 = vpack.c.bf16 %v503, %v503
          %v579 = vpack.c.bf16 %v506, %v506
          %v580 = vpack.c.bf16 %v508, %v508
          %v581 = vpack.c.bf16 %v511, %v511
          %v582 = vpack.c.bf16 %v513, %v513
          %v583 = vpack.c.bf16 %v516, %v516
          %v584 = vpack.c.bf16 %v518, %v518
          %v585 = vpack.c.bf16 %v521, %v521
          %v586 = vpack.c.bf16 %v523, %v523
          %v587 = vpack.c.bf16 %v526, %v526
          %v588 = vpack.c.bf16 %v528, %v528
          %v589 = vpack.c.bf16 %v531, %v531
          %v590 = vpack.c.bf16 %v533, %v533
          %v591 = vpack.c.bf16 %v536, %v536
          %v592 = vpack.c.bf16 %v538, %v538
          %v593 = vpack.c.bf16 %v541, %v541
          %v594 = vpack.c.bf16 %v543, %v543
          %v595 = vpack.c.bf16 %v546, %v546
          %v596 = vpack.c.bf16 %v548, %v548
          %v597 = vpack.c.bf16 %v551, %v551
          %v598 = vpack.c.bf16 %v553, %v553
          %v599 = vpack.c.bf16 %v556, %v556
          %v600 = vpack.c.bf16 %v558, %v558
          %v601 = vpack.c.bf16 %v561, %v561
          %v602 = vpack.c.bf16 %v563, %v563
          %v603 = vpack.c.bf16 %v566, %v566
          %v604 = vpack.c.bf16 %v568, %v568
          %v605 = vpack.c.bf16 %v571, %v571
          %v606 = vpack.c.bf16 %v573, %v573
          %s607 = sshra.s32 %s289, 7
          %s608 = sand.u32 %s289, 127
          %s609 = smul.addr %s607, 4
          %s610 = scalar_lea.vmem [#allocation2], %s609
          %611 = vst [vmem:[%s610] sm:$0xf] %v575
          %612 = vst [vmem:[%s610 + $0x8] sm:$0xf] %v576
          %613 = vst [vmem:[%s610 + $0x10] sm:$0xf] %v577
          %614 = vst [vmem:[%s610 + $0x18] sm:$0xf] %v578
          %615 = vst [vmem:[%s610 + $0x20] sm:$0xf] %v579
          %616 = vst [vmem:[%s610 + $0x28] sm:$0xf] %v580
          %617 = vst [vmem:[%s610 + $0x30] sm:$0xf] %v581
          %618 = vst [vmem:[%s610 + $0x38] sm:$0xf] %v582
          %619 = vst [vmem:[%s610 + $0x40] sm:$0xf] %v583
          %620 = vst [vmem:[%s610 + $0x48] sm:$0xf] %v584
          %621 = vst [vmem:[%s610 + $0x50] sm:$0xf] %v585
          %622 = vst [vmem:[%s610 + $0x58] sm:$0xf] %v586
          %623 = vst [vmem:[%s610 + $0x60] sm:$0xf] %v587
          %624 = vst [vmem:[%s610 + $0x68] sm:$0xf] %v588
          %625 = vst [vmem:[%s610 + $0x70] sm:$0xf] %v589
          %626 = vst [vmem:[%s610 + $0x78] sm:$0xf] %v590
          %627 = vst [vmem:[%s610 + $0x80] sm:$0xf] %v591
          %628 = vst [vmem:[%s610 + $0x88] sm:$0xf] %v592
          %629 = vst [vmem:[%s610 + $0x90] sm:$0xf] %v593
          %630 = vst [vmem:[%s610 + $0x98] sm:$0xf] %v594
          %631 = vst [vmem:[%s610 + $0xa0] sm:$0xf] %v595
          %632 = vst [vmem:[%s610 + $0xa8] sm:$0xf] %v596
          %633 = vst [vmem:[%s610 + $0xb0] sm:$0xf] %v597
          %634 = vst [vmem:[%s610 + $0xb8] sm:$0xf] %v598
          %635 = vst [vmem:[%s610 + $0xc0] sm:$0xf] %v599
          %636 = vst [vmem:[%s610 + $0xc8] sm:$0xf] %v600
          %637 = vst [vmem:[%s610 + $0xd0] sm:$0xf] %v601
          %638 = vst [vmem:[%s610 + $0xd8] sm:$0xf] %v602
          %639 = vst [vmem:[%s610 + $0xe0] sm:$0xf] %v603
          %640 = vst [vmem:[%s610 + $0xe8] sm:$0xf] %v604
          %641 = vst [vmem:[%s610 + $0xf0] sm:$0xf] %v605
          %642 = vst [vmem:[%s610 + $0xf8] sm:$0xf] %v606
        $region52: #{tpu_custom_call.1} parent=35 // pred_fallthru
          _
        %v643 = vld [vmem:[#allocation8] sm:$0xff]
        %v644 = vld [vmem:[#allocation8 + $0x8] sm:$0xff]
        %v645 = vld [vmem:[#allocation8 + $0x10] sm:$0xff]
        %v646 = vld [vmem:[#allocation8 + $0x18] sm:$0xff]
        %v647 = vld [vmem:[#allocation8 + $0x20] sm:$0xff]
        %v648 = vld [vmem:[#allocation8 + $0x28] sm:$0xff]
        %v649 = vld [vmem:[#allocation8 + $0x30] sm:$0xff]
        %v650 = vld [vmem:[#allocation8 + $0x38] sm:$0xff]
        %v651 = vld [vmem:[#allocation8 + $0x40] sm:$0xff]
        %v652 = vld [vmem:[#allocation8 + $0x48] sm:$0xff]
        %v653 = vld [vmem:[#allocation8 + $0x50] sm:$0xff]
        %v654 = vld [vmem:[#allocation8 + $0x58] sm:$0xff]
        %v655 = vld [vmem:[#allocation8 + $0x60] sm:$0xff]
        %v656 = vld [vmem:[#allocation8 + $0x68] sm:$0xff]
        %v657 = vld [vmem:[#allocation8 + $0x70] sm:$0xff]
        %v658 = vld [vmem:[#allocation8 + $0x78] sm:$0xff]
        %v659 = vld [vmem:[#allocation8 + $0x80] sm:$0xff]
        %v660 = vld [vmem:[#allocation8 + $0x88] sm:$0xff]
        %v661 = vld [vmem:[#allocation8 + $0x90] sm:$0xff]
        %v662 = vld [vmem:[#allocation8 + $0x98] sm:$0xff]
        %v663 = vld [vmem:[#allocation8 + $0xa0] sm:$0xff]
        %v664 = vld [vmem:[#allocation8 + $0xa8] sm:$0xff]
        %v665 = vld [vmem:[#allocation8 + $0xb0] sm:$0xff]
        %v666 = vld [vmem:[#allocation8 + $0xb8] sm:$0xff]
        %v667 = vld [vmem:[#allocation8 + $0xc0] sm:$0xff]
        %v668 = vld [vmem:[#allocation8 + $0xc8] sm:$0xff]
        %v669 = vld [vmem:[#allocation8 + $0xd0] sm:$0xff]
        %v670 = vld [vmem:[#allocation8 + $0xd8] sm:$0xff]
        %v671 = vld [vmem:[#allocation8 + $0xe0] sm:$0xff]
        %v672 = vld [vmem:[#allocation8 + $0xe8] sm:$0xff]
        %v673 = vld [vmem:[#allocation8 + $0xf0] sm:$0xff]
        %v674 = vld [vmem:[#allocation8 + $0xf8] sm:$0xff]
        %s675 = sshra.s32 %s289, 7
        %s676 = sand.u32 %s289, 127
        %s677 = smul.addr %s675, 4
        %s678 = scalar_lea.vmem [#allocation2], %s677
        %v679 = vld [vmem:[%s678] sm:$0xf]
        %v680 = vld [vmem:[%s678 + $0x8] sm:$0xf]
        %v681 = vld [vmem:[%s678 + $0x10] sm:$0xf]
        %v682 = vld [vmem:[%s678 + $0x18] sm:$0xf]
        %v683 = vld [vmem:[%s678 + $0x20] sm:$0xf]
        %v684 = vld [vmem:[%s678 + $0x28] sm:$0xf]
        %v685 = vld [vmem:[%s678 + $0x30] sm:$0xf]
        %v686 = vld [vmem:[%s678 + $0x38] sm:$0xf]
        %v687 = vld [vmem:[%s678 + $0x40] sm:$0xf]
        %v688 = vld [vmem:[%s678 + $0x48] sm:$0xf]
        %v689 = vld [vmem:[%s678 + $0x50] sm:$0xf]
        %v690 = vld [vmem:[%s678 + $0x58] sm:$0xf]
        %v691 = vld [vmem:[%s678 + $0x60] sm:$0xf]
        %v692 = vld [vmem:[%s678 + $0x68] sm:$0xf]
        %v693 = vld [vmem:[%s678 + $0x70] sm:$0xf]
        %v694 = vld [vmem:[%s678 + $0x78] sm:$0xf]
        %v695 = vld [vmem:[%s678 + $0x80] sm:$0xf]
        %v696 = vld [vmem:[%s678 + $0x88] sm:$0xf]
        %v697 = vld [vmem:[%s678 + $0x90] sm:$0xf]
        %v698 = vld [vmem:[%s678 + $0x98] sm:$0xf]
        %v699 = vld [vmem:[%s678 + $0xa0] sm:$0xf]
        %v700 = vld [vmem:[%s678 + $0xa8] sm:$0xf]
        %v701 = vld [vmem:[%s678 + $0xb0] sm:$0xf]
        %v702 = vld [vmem:[%s678 + $0xb8] sm:$0xf]
        %v703 = vld [vmem:[%s678 + $0xc0] sm:$0xf]
        %v704 = vld [vmem:[%s678 + $0xc8] sm:$0xf]
        %v705 = vld [vmem:[%s678 + $0xd0] sm:$0xf]
        %v706 = vld [vmem:[%s678 + $0xd8] sm:$0xf]
        %v707 = vld [vmem:[%s678 + $0xe0] sm:$0xf]
        %v708 = vld [vmem:[%s678 + $0xe8] sm:$0xf]
        %v709 = vld [vmem:[%s678 + $0xf0] sm:$0xf]
        %v710 = vld [vmem:[%s678 + $0xf8] sm:$0xf]
        %v711 = vld [vmem:[%s287] sm:$0x1]
        %v713 = vperm.slane %v711, 0
        %v747 = vunpack.c.l.b16 %v643
        %v748 = vunpack.c.h.b16 %v643
        %v749 = vunpack.c.l.b16 %v644
        %v750 = vunpack.c.h.b16 %v644
        %v751 = vunpack.c.l.b16 %v645
        %v752 = vunpack.c.h.b16 %v645
        %v753 = vunpack.c.l.b16 %v646
        %v754 = vunpack.c.h.b16 %v646
        %v755 = vunpack.c.l.b16 %v647
        %v756 = vunpack.c.h.b16 %v647
        %v757 = vunpack.c.l.b16 %v648
        %v758 = vunpack.c.h.b16 %v648
        %v759 = vunpack.c.l.b16 %v649
        %v760 = vunpack.c.h.b16 %v649
        %v761 = vunpack.c.l.b16 %v650
        %v762 = vunpack.c.h.b16 %v650
        %v763 = vunpack.c.l.b16 %v651
        %v764 = vunpack.c.h.b16 %v651
        %v765 = vunpack.c.l.b16 %v652
        %v766 = vunpack.c.h.b16 %v652
        %v767 = vunpack.c.l.b16 %v653
        %v768 = vunpack.c.h.b16 %v653
        %v769 = vunpack.c.l.b16 %v654
        %v770 = vunpack.c.h.b16 %v654
        %v771 = vunpack.c.l.b16 %v655
        %v772 = vunpack.c.h.b16 %v655
        %v773 = vunpack.c.l.b16 %v656
        %v774 = vunpack.c.h.b16 %v656
        %v775 = vunpack.c.l.b16 %v657
        %v776 = vunpack.c.h.b16 %v657
        %v777 = vunpack.c.l.b16 %v658
        %v778 = vunpack.c.h.b16 %v658
        %v779 = vunpack.c.l.b16 %v659
        %v780 = vunpack.c.h.b16 %v659
        %v781 = vunpack.c.l.b16 %v660
        %v782 = vunpack.c.h.b16 %v660
        %v783 = vunpack.c.l.b16 %v661
        %v784 = vunpack.c.h.b16 %v661
        %v785 = vunpack.c.l.b16 %v662
        %v786 = vunpack.c.h.b16 %v662
        %v787 = vunpack.c.l.b16 %v663
        %v788 = vunpack.c.h.b16 %v663
        %v789 = vunpack.c.l.b16 %v664
        %v790 = vunpack.c.h.b16 %v664
        %v791 = vunpack.c.l.b16 %v665
        %v792 = vunpack.c.h.b16 %v665
        %v793 = vunpack.c.l.b16 %v666
        %v794 = vunpack.c.h.b16 %v666
        %v795 = vunpack.c.l.b16 %v667
        %v796 = vunpack.c.h.b16 %v667
        %v797 = vunpack.c.l.b16 %v668
        %v798 = vunpack.c.h.b16 %v668
        %v799 = vunpack.c.l.b16 %v669
        %v800 = vunpack.c.h.b16 %v669
        %v801 = vunpack.c.l.b16 %v670
        %v802 = vunpack.c.h.b16 %v670
        %v803 = vunpack.c.l.b16 %v671
        %v804 = vunpack.c.h.b16 %v671
        %v805 = vunpack.c.l.b16 %v672
        %v806 = vunpack.c.h.b16 %v672
        %v807 = vunpack.c.l.b16 %v673
        %v808 = vunpack.c.h.b16 %v673
        %v809 = vunpack.c.l.b16 %v674
        %v810 = vunpack.c.h.b16 %v674
        %v811 = vpack.c.b16 %v749, %v747
        %v812 = vpack.c.b16 %v750, %v748
        %v813 = vpack.c.b16 %v753, %v751
        %v814 = vpack.c.b16 %v754, %v752
        %v815 = vpack.c.b16 %v757, %v755
        %v816 = vpack.c.b16 %v758, %v756
        %v817 = vpack.c.b16 %v761, %v759
        %v818 = vpack.c.b16 %v762, %v760
        %v819 = vpack.c.b16 %v765, %v763
        %v820 = vpack.c.b16 %v766, %v764
        %v821 = vpack.c.b16 %v769, %v767
        %v822 = vpack.c.b16 %v770, %v768
        %v823 = vpack.c.b16 %v773, %v771
        %v824 = vpack.c.b16 %v774, %v772
        %v825 = vpack.c.b16 %v777, %v775
        %v826 = vpack.c.b16 %v778, %v776
        %v827 = vpack.c.b16 %v781, %v779
        %v828 = vpack.c.b16 %v782, %v780
        %v829 = vpack.c.b16 %v785, %v783
        %v830 = vpack.c.b16 %v786, %v784
        %v831 = vpack.c.b16 %v789, %v787
        %v832 = vpack.c.b16 %v790, %v788
        %v833 = vpack.c.b16 %v793, %v791
        %v834 = vpack.c.b16 %v794, %v792
        %v835 = vpack.c.b16 %v797, %v795
        %v836 = vpack.c.b16 %v798, %v796
        %v837 = vpack.c.b16 %v801, %v799
        %v838 = vpack.c.b16 %v802, %v800
        %v839 = vpack.c.b16 %v805, %v803
        %v840 = vpack.c.b16 %v806, %v804
        %v841 = vpack.c.b16 %v809, %v807
        %v842 = vpack.c.b16 %v810, %v808
        %v907 = vunpack.c.l.b16 %v679
        %v908 = vunpack.c.l.b16 %v680
        %v909 = vunpack.c.l.b16 %v681
        %v910 = vunpack.c.l.b16 %v682
        %v911 = vunpack.c.l.b16 %v683
        %v912 = vunpack.c.l.b16 %v684
        %v913 = vunpack.c.l.b16 %v685
        %v914 = vunpack.c.l.b16 %v686
        %v915 = vunpack.c.l.b16 %v687
        %v916 = vunpack.c.l.b16 %v688
        %v917 = vunpack.c.l.b16 %v689
        %v918 = vunpack.c.l.b16 %v690
        %v919 = vunpack.c.l.b16 %v691
        %v920 = vunpack.c.l.b16 %v692
        %v921 = vunpack.c.l.b16 %v693
        %v922 = vunpack.c.l.b16 %v694
        %v923 = vunpack.c.l.b16 %v695
        %v924 = vunpack.c.l.b16 %v696
        %v925 = vunpack.c.l.b16 %v697
        %v926 = vunpack.c.l.b16 %v698
        %v927 = vunpack.c.l.b16 %v699
        %v928 = vunpack.c.l.b16 %v700
        %v929 = vunpack.c.l.b16 %v701
        %v930 = vunpack.c.l.b16 %v702
        %v931 = vunpack.c.l.b16 %v703
        %v932 = vunpack.c.l.b16 %v704
        %v933 = vunpack.c.l.b16 %v705
        %v934 = vunpack.c.l.b16 %v706
        %v935 = vunpack.c.l.b16 %v707
        %v936 = vunpack.c.l.b16 %v708
        %v937 = vunpack.c.l.b16 %v709
        %v938 = vunpack.c.l.b16 %v710
        %v939 = vpack.c.b16 %v908, %v907
        %v940 = vpack.c.b16 %v910, %v909
        %v941 = vpack.c.b16 %v912, %v911
        %v942 = vpack.c.b16 %v914, %v913
        %v943 = vpack.c.b16 %v916, %v915
        %v944 = vpack.c.b16 %v918, %v917
        %v945 = vpack.c.b16 %v920, %v919
        %v946 = vpack.c.b16 %v922, %v921
        %v947 = vpack.c.b16 %v924, %v923
        %v948 = vpack.c.b16 %v926, %v925
        %v949 = vpack.c.b16 %v928, %v927
        %v950 = vpack.c.b16 %v930, %v929
        %v951 = vpack.c.b16 %v932, %v931
        %v952 = vpack.c.b16 %v934, %v933
        %v953 = vpack.c.b16 %v936, %v935
        %v954 = vpack.c.b16 %v938, %v937
        %971 = vmatpush.bf16.msra.mxu0 %v946
        %972 = vmatpush.bf16.msra.mxu0 %v945
        %973 = vmatpush.bf16.msra.mxu0 %v944
        %974 = vmatpush.bf16.msra.mxu0 %v943
        %975 = vmatpush.bf16.msra.mxu0 %v942
        %976 = vmatpush.bf16.msra.mxu0 %v941
        %977 = vmatpush.bf16.msra.mxu0 %v940
        %978 = vmatpush.bf16.msra.mxu0 %v939
        %979 = vmatmul.bf16.gmra.mxu0 %v811
        %v980 = vpop.f32.mrf.mxu0
        %v981 = vadd.f32 %v713, %v980
        %v982 = vpop.f32.mrf.mxu0
        %v983 = vadd.f32 %v713, %v982
        %984 = vmatmul.bf16.gmra.mxu0 %v813
        %v985 = vpop.f32.mrf.mxu0
        %v986 = vadd.f32 %v713, %v985
        %v987 = vpop.f32.mrf.mxu0
        %v988 = vadd.f32 %v713, %v987
        %989 = vmatmul.bf16.gmra.mxu0 %v815
        %v990 = vpop.f32.mrf.mxu0
        %v991 = vadd.f32 %v713, %v990
        %v992 = vpop.f32.mrf.mxu0
        %v993 = vadd.f32 %v713, %v992
        %994 = vmatmul.bf16.gmra.mxu0 %v817
        %v995 = vpop.f32.mrf.mxu0
        %v996 = vadd.f32 %v713, %v995
        %v997 = vpop.f32.mrf.mxu0
        %v998 = vadd.f32 %v713, %v997
        %999 = vmatmul.bf16.gmra.mxu0 %v819
        %v1000 = vpop.f32.mrf.mxu0
        %v1001 = vadd.f32 %v713, %v1000
        %v1002 = vpop.f32.mrf.mxu0
        %v1003 = vadd.f32 %v713, %v1002
        %1004 = vmatmul.bf16.gmra.mxu0 %v821
        %v1005 = vpop.f32.mrf.mxu0
        %v1006 = vadd.f32 %v713, %v1005
        %v1007 = vpop.f32.mrf.mxu0
        %v1008 = vadd.f32 %v713, %v1007
        %1009 = vmatmul.bf16.gmra.mxu0 %v823
        %v1010 = vpop.f32.mrf.mxu0
        %v1011 = vadd.f32 %v713, %v1010
        %v1012 = vpop.f32.mrf.mxu0
        %v1013 = vadd.f32 %v713, %v1012
        %1014 = vmatmul.bf16.gmra.mxu0 %v825
        %v1015 = vpop.f32.mrf.mxu0
        %v1016 = vadd.f32 %v713, %v1015
        %v1017 = vpop.f32.mrf.mxu0
        %v1018 = vadd.f32 %v713, %v1017
        %1019 = vmatmul.bf16.gmra.mxu0 %v827
        %v1020 = vpop.f32.mrf.mxu0
        %v1021 = vadd.f32 %v713, %v1020
        %v1022 = vpop.f32.mrf.mxu0
        %v1023 = vadd.f32 %v713, %v1022
        %1024 = vmatmul.bf16.gmra.mxu0 %v829
        %v1025 = vpop.f32.mrf.mxu0
        %v1026 = vadd.f32 %v713, %v1025
        %v1027 = vpop.f32.mrf.mxu0
        %v1028 = vadd.f32 %v713, %v1027
        %1029 = vmatmul.bf16.gmra.mxu0 %v831
        %v1030 = vpop.f32.mrf.mxu0
        %v1031 = vadd.f32 %v713, %v1030
        %v1032 = vpop.f32.mrf.mxu0
        %v1033 = vadd.f32 %v713, %v1032
        %1034 = vmatmul.bf16.gmra.mxu0 %v833
        %v1035 = vpop.f32.mrf.mxu0
        %v1036 = vadd.f32 %v713, %v1035
        %v1037 = vpop.f32.mrf.mxu0
        %v1038 = vadd.f32 %v713, %v1037
        %1039 = vmatmul.bf16.gmra.mxu0 %v835
        %v1040 = vpop.f32.mrf.mxu0
        %v1041 = vadd.f32 %v713, %v1040
        %v1042 = vpop.f32.mrf.mxu0
        %v1043 = vadd.f32 %v713, %v1042
        %1044 = vmatmul.bf16.gmra.mxu0 %v837
        %v1045 = vpop.f32.mrf.mxu0
        %v1046 = vadd.f32 %v713, %v1045
        %v1047 = vpop.f32.mrf.mxu0
        %v1048 = vadd.f32 %v713, %v1047
        %1049 = vmatmul.bf16.gmra.mxu0 %v839
        %v1050 = vpop.f32.mrf.mxu0
        %v1051 = vadd.f32 %v713, %v1050
        %v1052 = vpop.f32.mrf.mxu0
        %v1053 = vadd.f32 %v713, %v1052
        %1054 = vmatmul.bf16.gmra.mxu0 %v841
        %v1055 = vpop.f32.mrf.mxu0
        %v1056 = vadd.f32 %v713, %v1055
        %v1057 = vpop.f32.mrf.mxu0
        %v1058 = vadd.f32 %v713, %v1057
        %1059 = vdwg.mxu0
        %1060 = vmatpush.bf16.msra.mxu0 %v954
        %1061 = vmatpush.bf16.msra.mxu0 %v953
        %1062 = vmatpush.bf16.msra.mxu0 %v952
        %1063 = vmatpush.bf16.msra.mxu0 %v951
        %1064 = vmatpush.bf16.msra.mxu0 %v950
        %1065 = vmatpush.bf16.msra.mxu0 %v949
        %1066 = vmatpush.bf16.msra.mxu0 %v948
        %1067 = vmatpush.bf16.msra.mxu0 %v947
        %1068 = vmatmul.bf16.gmra.mxu0 %v812
        %v1069 = vpop.f32.mrf.mxu0
        %v1070 = vadd.f32 %v981, %v1069
        %v1071 = vpop.f32.mrf.mxu0
        %v1072 = vadd.f32 %v983, %v1071
        %1073 = vmatmul.bf16.gmra.mxu0 %v814
        %v1074 = vpop.f32.mrf.mxu0
        %v1075 = vadd.f32 %v986, %v1074
        %v1076 = vpop.f32.mrf.mxu0
        %v1077 = vadd.f32 %v988, %v1076
        %1078 = vmatmul.bf16.gmra.mxu0 %v816
        %v1079 = vpop.f32.mrf.mxu0
        %v1080 = vadd.f32 %v991, %v1079
        %v1081 = vpop.f32.mrf.mxu0
        %v1082 = vadd.f32 %v993, %v1081
        %1083 = vmatmul.bf16.gmra.mxu0 %v818
        %v1084 = vpop.f32.mrf.mxu0
        %v1085 = vadd.f32 %v996, %v1084
        %v1086 = vpop.f32.mrf.mxu0
        %v1087 = vadd.f32 %v998, %v1086
        %1088 = vmatmul.bf16.gmra.mxu0 %v820
        %v1089 = vpop.f32.mrf.mxu0
        %v1090 = vadd.f32 %v1001, %v1089
        %v1091 = vpop.f32.mrf.mxu0
        %v1092 = vadd.f32 %v1003, %v1091
        %1093 = vmatmul.bf16.gmra.mxu0 %v822
        %v1094 = vpop.f32.mrf.mxu0
        %v1095 = vadd.f32 %v1006, %v1094
        %v1096 = vpop.f32.mrf.mxu0
        %v1097 = vadd.f32 %v1008, %v1096
        %1098 = vmatmul.bf16.gmra.mxu0 %v824
        %v1099 = vpop.f32.mrf.mxu0
        %v1100 = vadd.f32 %v1011, %v1099
        %v1101 = vpop.f32.mrf.mxu0
        %v1102 = vadd.f32 %v1013, %v1101
        %1103 = vmatmul.bf16.gmra.mxu0 %v826
        %v1104 = vpop.f32.mrf.mxu0
        %v1105 = vadd.f32 %v1016, %v1104
        %v1106 = vpop.f32.mrf.mxu0
        %v1107 = vadd.f32 %v1018, %v1106
        %1108 = vmatmul.bf16.gmra.mxu0 %v828
        %v1109 = vpop.f32.mrf.mxu0
        %v1110 = vadd.f32 %v1021, %v1109
        %v1111 = vpop.f32.mrf.mxu0
        %v1112 = vadd.f32 %v1023, %v1111
        %1113 = vmatmul.bf16.gmra.mxu0 %v830
        %v1114 = vpop.f32.mrf.mxu0
        %v1115 = vadd.f32 %v1026, %v1114
        %v1116 = vpop.f32.mrf.mxu0
        %v1117 = vadd.f32 %v1028, %v1116
        %1118 = vmatmul.bf16.gmra.mxu0 %v832
        %v1119 = vpop.f32.mrf.mxu0
        %v1120 = vadd.f32 %v1031, %v1119
        %v1121 = vpop.f32.mrf.mxu0
        %v1122 = vadd.f32 %v1033, %v1121
        %1123 = vmatmul.bf16.gmra.mxu0 %v834
        %v1124 = vpop.f32.mrf.mxu0
        %v1125 = vadd.f32 %v1036, %v1124
        %v1126 = vpop.f32.mrf.mxu0
        %v1127 = vadd.f32 %v1038, %v1126
        %1128 = vmatmul.bf16.gmra.mxu0 %v836
        %v1129 = vpop.f32.mrf.mxu0
        %v1130 = vadd.f32 %v1041, %v1129
        %v1131 = vpop.f32.mrf.mxu0
        %v1132 = vadd.f32 %v1043, %v1131
        %1133 = vmatmul.bf16.gmra.mxu0 %v838
        %v1134 = vpop.f32.mrf.mxu0
        %v1135 = vadd.f32 %v1046, %v1134
        %v1136 = vpop.f32.mrf.mxu0
        %v1137 = vadd.f32 %v1048, %v1136
        %1138 = vmatmul.bf16.gmra.mxu0 %v840
        %v1139 = vpop.f32.mrf.mxu0
        %v1140 = vadd.f32 %v1051, %v1139
        %v1141 = vpop.f32.mrf.mxu0
        %v1142 = vadd.f32 %v1053, %v1141
        %1143 = vmatmul.bf16.gmra.mxu0 %v842
        %v1144 = vpop.f32.mrf.mxu0
        %v1145 = vadd.f32 %v1056, %v1144
        %v1146 = vpop.f32.mrf.mxu0
        %v1147 = vadd.f32 %v1058, %v1146
        %1148 = vdwg.mxu0
        %1149 = vst [vmem:[%s283] sm:$0xff] %v1070
        %1150 = vst [vmem:[%s283 + $0x8] sm:$0xff] %v1072
        %1151 = vst [vmem:[%s283 + $0x10] sm:$0xff] %v1075
        %1152 = vst [vmem:[%s283 + $0x18] sm:$0xff] %v1077
        %1153 = vst [vmem:[%s283 + $0x20] sm:$0xff] %v1080
        %1154 = vst [vmem:[%s283 + $0x28] sm:$0xff] %v1082
        %1155 = vst [vmem:[%s283 + $0x30] sm:$0xff] %v1085
        %1156 = vst [vmem:[%s283 + $0x38] sm:$0xff] %v1087
        %1157 = vst [vmem:[%s283 + $0x40] sm:$0xff] %v1090
        %1158 = vst [vmem:[%s283 + $0x48] sm:$0xff] %v1092
        %1159 = vst [vmem:[%s283 + $0x50] sm:$0xff] %v1095
        %1160 = vst [vmem:[%s283 + $0x58] sm:$0xff] %v1097
        %1161 = vst [vmem:[%s283 + $0x60] sm:$0xff] %v1100
        %1162 = vst [vmem:[%s283 + $0x68] sm:$0xff] %v1102
        %1163 = vst [vmem:[%s283 + $0x70] sm:$0xff] %v1105
        %1164 = vst [vmem:[%s283 + $0x78] sm:$0xff] %v1107
        %1165 = vst [vmem:[%s283 + $0x80] sm:$0xff] %v1110
        %1166 = vst [vmem:[%s283 + $0x88] sm:$0xff] %v1112
        %1167 = vst [vmem:[%s283 + $0x90] sm:$0xff] %v1115
        %1168 = vst [vmem:[%s283 + $0x98] sm:$0xff] %v1117
        %1169 = vst [vmem:[%s283 + $0xa0] sm:$0xff] %v1120
        %1170 = vst [vmem:[%s283 + $0xa8] sm:$0xff] %v1122
        %1171 = vst [vmem:[%s283 + $0xb0] sm:$0xff] %v1125
        %1172 = vst [vmem:[%s283 + $0xb8] sm:$0xff] %v1127
        %1173 = vst [vmem:[%s283 + $0xc0] sm:$0xff] %v1130
        %1174 = vst [vmem:[%s283 + $0xc8] sm:$0xff] %v1132
        %1175 = vst [vmem:[%s283 + $0xd0] sm:$0xff] %v1135
        %1176 = vst [vmem:[%s283 + $0xd8] sm:$0xff] %v1137
        %1177 = vst [vmem:[%s283 + $0xe0] sm:$0xff] %v1140
        %1178 = vst [vmem:[%s283 + $0xe8] sm:$0xff] %v1142
        %1179 = vst [vmem:[%s283 + $0xf0] sm:$0xff] %v1145
        %1180 = vst [vmem:[%s283 + $0xf8] sm:$0xff] %v1147
        %s1181 = sand.u32 %s143, 1
        %s1182 = scalar_lea.sflag [#allocation5], %s1181
        %s1183 = sand.u32 %s143, 1
        %s1184 = smul.addr %s1183, 256
        %s1185 = scalar_lea.vmem [#allocation9], %s1184
        // Predicated region
        $region53: #{tpu_custom_call.1} parent=35 // pred_check
          %p1186 = pneg %p153
        $region54: #{tpu_custom_call.1} parent=35 // pred_check_branch
          %1188 = sbr.rel (%p1186) target = $region56
        $region55: #{tpu_custom_call.1} parent=35 // pred_region
          %s1189 = smul.u32 32, %s26
          %1191 = vsyncadd %s1182, 0
          %s1192 = smul.addr %s1189, 2
          %s1193 = sadd.s32 %s27, %s1192
          %s1194 = smul.addr %s1193, 8
          %s1195 = scalar_lea.hbm %s4, %s1194
          %s1196 = sshll.u32 %s1185, 4
          %s1197 = int_to_ptr.vmem [resolvable:$true] %s1196
          %s1198 = sshll.u32 %s1195, 4
          %s1199 = int_to_ptr.hbm [resolvable:$true] %s1198
          %1204 = dma.vmem_to_hbm [thread:$0]  %s1197, 4096, %s1199, %s1182, 128, 256, 8
        $region56: #{tpu_custom_call.1} parent=35 // pred_fallthru
          _
      $region36: #{tpu_custom_call.1} parent=5 // pred_fallthru
        _
      %p1205 = scmp.le.s32.totalorder 2, %s17
      // Predicated region
      $region57: #{tpu_custom_call.1} parent=5 // pred_check
        %p1206 = pneg %p1205
      $region58: #{tpu_custom_call.1} parent=5 // pred_check_branch
        %1208 = sbr.rel (%p1206) target = $region60
      $region59: #{tpu_custom_call.1} parent=5 // pred_region
        %s1209 = ssub.s32 %s17, 2
        // Predicated region
        $region61: #{tpu_custom_call.1} parent=59 // pred_check
          %p1210 = pneg %p159
        $region62: #{tpu_custom_call.1} parent=59 // pred_check_branch
          %1212 = sbr.rel (%p1210) target = $region64
        $region63: #{tpu_custom_call.1} parent=59 // pred_region
          %s1213 = sand.u32 %s144, 1
          %s1214 = scalar_lea.sflag [#allocation5], %s1213
          %s1215 = sand.u32 %s144, 1
          %s1216 = smul.addr %s1215, 256
          %s1217 = scalar_lea.vmem [#allocation9], %s1216
          %1219 = dma.done %s1214, 4096
        $region64: #{tpu_custom_call.1} parent=59 // pred_fallthru
          _
      $region60: #{tpu_custom_call.1} parent=5 // pred_fallthru
        _
    $region6: #{tpu_custom_call.1} parent=1 // loop_footer
      %s21 = sadd.s32 1, %s17
    $region7: #{tpu_custom_call.1} parent=1 // loop_footer_branch
      %16 = sbr.rel target = $region3
    $region8: #{tpu_custom_call.1} parent=1 // loop_exit
      _
    %1220 = vsyncpa [#allocation4], 1
    %s1221 = scalar_lea.sflag [#allocation4], 1
    %1222 = vsyncpa %s1221, 1
    %1223 = vsyncpa [#allocation7], 1
    %s1224 = scalar_lea.sflag [#allocation7], 1
    %1225 = vsyncpa %s1224, 1
    %1226 = vsyncpa [#allocation5], 1
    %s1227 = scalar_lea.sflag [#allocation5], 1
    %1228 = vsyncpa %s1227, 1

// kernel: tpu_custom_call.1
$region0: #{tpu_custom_call.1}
  #allocation0 [shape = 'u32[]', space=smem, size = 0x4, offset = 0x4, fixed_abs, tag = 'smem constant byte address 0x4 - core index']
  #allocation1 [shape = 'u32[72,128]{1,0:T(1,128)}', space=vmem, size = 0x9000, scoped, tag = 'internal scratch']
  #allocation2 [shape = 'bf16[256,256]{1,0:T(8,128)(2,1)}', space=vmem, size = 0x20000, scoped, tag = 'scratch operand']
  %s0 = inlined_call_operand.hbm [shape: bf16[256,128], index: 0, kind: input, shape index: {}]
  %s1 = inlined_call_operand.hbm [shape: bf16[128,256], index: 1, kind: input, shape index: {}]
  %s2 = inlined_call_operand.hbm [shape: bf16[256,256], index: 2, kind: input, shape index: {}]
  %s3 = inlined_call_operand.vmem [shape: f32[1,256], index: 3, kind: input, shape index: {}]
  %s4 = inlined_call_operand.hbm [shape: f32[256,256], index: 4, kind: output, shape index: {}]
  %s5 = sld [smem:[#allocation0]]
  $region65: #{tpu_custom_call.1} parent=0
    _
  %s7 = ssub.s32 1, %s5
  %s8 = scalar_select 0, %s7, %s5
  $region1: #{tpu_custom_call.1} parent=0
    #allocation3 [shape = 'u8[65536]{0}', space=vmem, size = 0x10000, scoped, tag = 'input window, operand 0, single buffered']
    #allocation4 [shape = 's32[2]{0}', space=sflag, size = 0x8, scoped, tag = 'scoped memory for tpu_custom_call.1']
    #allocation5 [shape = 's32[2]{0}', space=sflag, size = 0x8, scoped, tag = 'scoped memory for tpu_custom_call.1']
    #allocation6 [shape = 'u8[65536]{0}', space=vmem, size = 0x10000, scoped, tag = 'input window, operand 1']
    #allocation7 [shape = 's32[2]{0}', space=sflag, size = 0x8, scoped, tag = 'scoped memory for tpu_custom_call.1']
    #allocation8 [shape = 'u8[131072]{0}', space=vmem, size = 0x20000, scoped, tag = 'input window, operand 2, single buffered']
    #allocation9 [shape = 'u8[262144]{0}', space=vmem, size = 0x40000, scoped, tag = 'output window, operand 0']
    %9 = vsyncpa [#allocation4], 0
    %10 = vsyncpa [#allocation7], 0
    %s11 = scalar_lea.sflag [#allocation7], 1
    %12 = vsyncpa %s11, 0
    %13 = vsyncpa [#allocation5], 0
    %s14 = scalar_lea.sflag [#allocation5], 1
    %15 = vsyncpa %s14, 0
    loop: start=0, step=1, limit=4
    $region2: #{tpu_custom_call.1} parent=1 // loop_pre_header
      _
    $region3: #{tpu_custom_call.1} parent=1 // loop_header
      %s17 = sphi 0, %s21
      %p18 = scmp.ge.s32.totalorder %s17, 4
      %s24 = sphi 0, %s36
      %s25 = sphi 0, %s32
      %s26 = sphi 0, %s24
      %s27 = sphi 0, %s25
      %s28 = sphi 0, %s26
      %s29 = sphi 0, %s27
      %s37 = sphi 0, %s37
      %s39 = sphi 0, %s37
      %s40 = sphi 0, %s39
      %s54 = sphi 0, %s40
      %s60 = sphi 0, %s62
      %s63 = sphi 0, %s60
      %s64 = sphi 0, %s63
      %s80 = sphi 0, %s64
      %s86 = sphi 0, %s88
      %s89 = sphi 0, %s86
      %s90 = sphi 0, %s89
      %s106 = sphi 0, %s90
      %s112 = sphi 0, %s114
      %s115 = sphi 0, %s112
      %s116 = sphi 0, %s115
      %s132 = sphi 0, %s116
      %s140 = sphi 0, %s142
      %s143 = sphi 0, %s140
      %s144 = sphi 0, %s143
      %s160 = sphi 0, %s144
    $region4: #{tpu_custom_call.1} parent=1 // loop_header_branch
      %20 = sbr.rel (%p18) target = $region8
    $region5: #{tpu_custom_call.1} parent=1 // loop_body
      %s22 = ssub.s32 %s17, 1
      %s23 = ssub.s32 %s17, 2
      %s30 = sadd.s32 1, %s25
      %p31 = scmp.ge.s32.totalorder %s30, 2
      %s32 = scalar_select %p31, 0, %s30
      %s33 = sadd.s32 1, %s24
      %s34 = scalar_select %p31, %s33, %s24
      %p35 = scmp.ge.s32.totalorder %s34, 1
      %s36 = scalar_select %p35, 0, %s34
      %s38 = sadd.s32 %s37, 1
      %p41 = scmp.eq.s32.totalorder %s17, 1
      %p42 = scmp.ne.s32.totalorder %s37, %s39
      %p43 = scmp.eq.s32.totalorder %s17, 0
      %p44 = por %p42, %p43
      %p45 = scmp.ne.s32.totalorder %s37, %s39
      %p46 = scmp.eq.s32.totalorder %s22, 1
      %p47 = por %p45, %p46
      %p48 = scmp.ne.s32.totalorder %s39, %s40
      %p49 = scmp.eq.s32.totalorder %s22, 0
      %p50 = por %p48, %p49
      %p51 = scmp.ne.s32.totalorder %s39, %s40
      %p52 = scmp.eq.s32.totalorder %s23, 1
      %p53 = por %p51, %p52
      %p55 = scmp.ne.s32.totalorder %s40, %s54
      %p56 = scmp.eq.s32.totalorder %s23, 0
      %p57 = por %p55, %p56
      %s58 = ssub.s32 %s25, %s32
      %p59 = scmp.eq.s32.totalorder %s58, 0
      %s61 = sadd.s32 %s60, 1
      %s62 = scalar_select %p59, %s60, %s61
      %p65 = pneg %p59
      %p66 = scmp.eq.s32.totalorder %s17, 1
      %p67 = por %p65, %p66
      %p68 = scmp.ne.s32.totalorder %s60, %s63
      %p69 = scmp.eq.s32.totalorder %s17, 0
      %p70 = por %p68, %p69
      %p71 = scmp.ne.s32.totalorder %s60, %s63
      %p72 = scmp.eq.s32.totalorder %s22, 1
      %p73 = por %p71, %p72
      %p74 = scmp.ne.s32.totalorder %s63, %s64
      %p75 = scmp.eq.s32.totalorder %s22, 0
      %p76 = por %p74, %p75
      %p77 = scmp.ne.s32.totalorder %s63, %s64
      %p78 = scmp.eq.s32.totalorder %s23, 1
      %p79 = por %p77, %p78
      %p81 = scmp.ne.s32.totalorder %s64, %s80
      %p82 = scmp.eq.s32.totalorder %s23, 0
      %p83 = por %p81, %p82
      %s84 = ssub.s32 %s24, %s36
      %p85 = scmp.eq.s32.totalorder %s84, 0
      %s87 = sadd.s32 %s86, 1
      %s88 = scalar_select %p85, %s86, %s87
      %p91 = pneg %p85
      %p92 = scmp.eq.s32.totalorder %s17, 1
      %p93 = por %p91, %p92
      %p94 = scmp.ne.s32.totalorder %s86, %s89
      %p95 = scmp.eq.s32.totalorder %s17, 0
      %p96 = por %p94, %p95
      %p97 = scmp.ne.s32.totalorder %s86, %s89
      %p98 = scmp.eq.s32.totalorder %s22, 1
      %p99 = por %p97, %p98
      %p100 = scmp.ne.s32.totalorder %s89, %s90
      %p101 = scmp.eq.s32.totalorder %s22, 0
      %p102 = por %p100, %p101
      %p103 = scmp.ne.s32.totalorder %s89, %s90
      %p104 = scmp.eq.s32.totalorder %s23, 1
      %p105 = por %p103, %p104
      %p107 = scmp.ne.s32.totalorder %s90, %s106
      %p108 = scmp.eq.s32.totalorder %s23, 0
      %p109 = por %p107, %p108
      %s110 = ssub.s32 %s25, %s32
      %p111 = scmp.eq.s32.totalorder %s110, 0
      %s113 = sadd.s32 %s112, 1
      %s114 = scalar_select %p111, %s112, %s113
      %p117 = pneg %p111
      %p118 = scmp.eq.s32.totalorder %s17, 1
      %p119 = por %p117, %p118
      %p120 = scmp.ne.s32.totalorder %s112, %s115
      %p121 = scmp.eq.s32.totalorder %s17, 0
      %p122 = por %p120, %p121
      %p123 = scmp.ne.s32.totalorder %s112, %s115
      %p124 = scmp.eq.s32.totalorder %s22, 1
      %p125 = por %p123, %p124
      %p126 = scmp.ne.s32.totalorder %s115, %s116
      %p127 = scmp.eq.s32.totalorder %s22, 0
      %p128 = por %p126, %p127
      %p129 = scmp.ne.s32.totalorder %s115, %s116
      %p130 = scmp.eq.s32.totalorder %s23, 1
      %p131 = por %p129, %p130
      %p133 = scmp.ne.s32.totalorder %s116, %s132
      %p134 = scmp.eq.s32.totalorder %s23, 0
      %p135 = por %p133, %p134
      %s136 = ssub.s32 %s24, %s36
      %s137 = ssub.s32 %s25, %s32
      %s138 = sor.u32 %s136, %s137
      %p139 = scmp.eq.s32.totalorder %s138, 0
      %s141 = sadd.s32 %s140, 1
      %s142 = scalar_select %p139, %s140, %s141
      %p145 = pneg %p139
      %p146 = scmp.eq.s32.totalorder %s17, 1
      %p147 = por %p145, %p146
      %p148 = scmp.ne.s32.totalorder %s140, %s143
      %p149 = scmp.eq.s32.totalorder %s17, 0
      %p150 = por %p148, %p149
      %p151 = scmp.ne.s32.totalorder %s140, %s143
      %p152 = scmp.eq.s32.totalorder %s22, 1
      %p153 = por %p151, %p152
      %p154 = scmp.ne.s32.totalorder %s143, %s144
      %p155 = scmp.eq.s32.totalorder %s22, 0
      %p156 = por %p154, %p155
      %p157 = scmp.ne.s32.totalorder %s143, %s144
      %p158 = scmp.eq.s32.totalorder %s23, 1
      %p159 = por %p157, %p158
      %p161 = scmp.ne.s32.totalorder %s144, %s160
      %p162 = scmp.eq.s32.totalorder %s23, 0
      %p163 = por %p161, %p162
      %p164 = scmp.le.s32.totalorder 1, %s17
      %p165 = scmp.lt.s32.totalorder %s17, 3
      %p166 = pnand %p164, %p165
      %p167 = pneg %p166
      // Predicated region
      $region9: #{tpu_custom_call.1} parent=5 // pred_check
        _
      $region10: #{tpu_custom_call.1} parent=5 // pred_check_branch
        %169 = sbr.rel (%p166) target = $region12
      $region11: #{tpu_custom_call.1} parent=5 // pred_region
        %s170 = ssub.s32 %s17, 1
        // Predicated region
        $region13: #{tpu_custom_call.1} parent=11 // pred_check
          %p171 = pneg %p50
        $region14: #{tpu_custom_call.1} parent=11 // pred_check_branch
          %173 = sbr.rel (%p171) target = $region16
        $region15: #{tpu_custom_call.1} parent=11 // pred_region
          %175 = vsyncadd [#allocation4], 0
          %s176 = sshll.u32 %s0, 4
          %s177 = int_to_ptr.hbm [resolvable:$true] %s176
          %s178 = sshll.u32 [#allocation3], 4
          %s179 = int_to_ptr.vmem [resolvable:$true] %s178
          %184 = dma.hbm_to_vmem [thread:$0]  %s177, 2048, %s179, [#allocation4], 64, 64, 4
        $region16: #{tpu_custom_call.1} parent=11 // pred_fallthru
          _
        // Predicated region
        $region17: #{tpu_custom_call.1} parent=11 // pred_check
          %p185 = pneg %p102
        $region18: #{tpu_custom_call.1} parent=11 // pred_check_branch
          %187 = sbr.rel (%p185) target = $region20
        $region19: #{tpu_custom_call.1} parent=11 // pred_region
          %s188 = smul.u32 32, %s26
          %190 = vsyncadd [#allocation7], 0
          %s191 = smul.addr %s188, 2
          %s192 = smul.addr %s191, 4
          %s193 = scalar_lea.hbm %s2, %s192
          %s194 = sshll.u32 %s193, 4
          %s195 = int_to_ptr.hbm [resolvable:$true] %s194
          %s196 = sshll.u32 [#allocation8], 4
          %s197 = int_to_ptr.vmem [resolvable:$true] %s196
          %202 = dma.hbm_to_vmem [thread:$0]  %s195, 4096, %s197, [#allocation7], 128, 128, 8
        $region20: #{tpu_custom_call.1} parent=11 // pred_fallthru
          _
      $region12: #{tpu_custom_call.1} parent=5 // pred_fallthru
        _
      %p203 = scmp.lt.s32.totalorder %s17, 2
      // Predicated region
      $region21: #{tpu_custom_call.1} parent=5 // pred_check
        %p204 = pneg %p203
      $region22: #{tpu_custom_call.1} parent=5 // pred_check_branch
        %206 = sbr.rel (%p204) target = $region24
      $region23: #{tpu_custom_call.1} parent=5 // pred_region
        // Predicated region
        $region25: #{tpu_custom_call.1} parent=23 // pred_check
          %p207 = pneg %p70
        $region26: #{tpu_custom_call.1} parent=23 // pred_check_branch
          %209 = sbr.rel (%p207) target = $region28
        $region27: #{tpu_custom_call.1} parent=23 // pred_region
          %s210 = sand.u32 %s17, 1
          %s211 = scalar_lea.sflag [#allocation7], %s210
          %s212 = sand.u32 %s60, 1
          %s213 = smul.addr %s212, 64
          %s214 = scalar_lea.vmem [#allocation6], %s213
          %216 = vsyncadd %s211, 0
          %s217 = smul.addr %s25, 4
          %s218 = scalar_lea.hbm %s1, %s217
          %s219 = sshll.u32 %s218, 4
          %s220 = int_to_ptr.hbm [resolvable:$true] %s219
          %s221 = sshll.u32 %s214, 4
          %s222 = int_to_ptr.vmem [resolvable:$true] %s221
          %227 = dma.hbm_to_vmem [thread:$0]  %s220, 1024, %s222, %s211, 128, 64, 4
        $region28: #{tpu_custom_call.1} parent=23 // pred_fallthru
          _
        // Predicated region
        $region29: #{tpu_custom_call.1} parent=23 // pred_check
          %p228 = pneg %p122
        $region30: #{tpu_custom_call.1} parent=23 // pred_check_branch
          %230 = sbr.rel (%p228) target = $region32
        $region31: #{tpu_custom_call.1} parent=23 // pred_region
          %p231 = scmp.lt.s32.totalorder %s25, 1
          %s232 = scalar_select %p231, %s25, 1
          %s233 = scalar_lea.vmem %s3, %s232
        $region32: #{tpu_custom_call.1} parent=23 // pred_fallthru
          _
      $region24: #{tpu_custom_call.1} parent=5 // pred_fallthru
        _
      %p234 = scmp.le.s32.totalorder 1, %s17
      %p235 = scmp.lt.s32.totalorder %s17, 3
      %p236 = pnand %p234, %p235
      %p237 = pneg %p236
      // Predicated region
      $region33: #{tpu_custom_call.1} parent=5 // pred_check
        _
      $region34: #{tpu_custom_call.1} parent=5 // pred_check_branch
        %239 = sbr.rel (%p236) target = $region36
      $region35: #{tpu_custom_call.1} parent=5 // pred_region
        %s240 = ssub.s32 %s17, 1
        // Predicated region
        $region37: #{tpu_custom_call.1} parent=35 // pred_check
          %p241 = pneg %p50
        $region38: #{tpu_custom_call.1} parent=35 // pred_check_branch
          %243 = sbr.rel (%p241) target = $region40
        $region39: #{tpu_custom_call.1} parent=35 // pred_region
          %245 = dma.done [#allocation4], 2048
        $region40: #{tpu_custom_call.1} parent=35 // pred_fallthru
          _
        %s246 = sand.u32 %s22, 1
        %s247 = scalar_lea.sflag [#allocation7], %s246
        %s248 = sand.u32 %s63, 1
        %s249 = smul.addr %s248, 64
        %s250 = scalar_lea.vmem [#allocation6], %s249
        // Predicated region
        $region41: #{tpu_custom_call.1} parent=35 // pred_check
          %p251 = pneg %p76
        $region42: #{tpu_custom_call.1} parent=35 // pred_check_branch
          %253 = sbr.rel (%p251) target = $region44
        $region43: #{tpu_custom_call.1} parent=35 // pred_region
          %255 = dma.done %s247, 1024
        $region44: #{tpu_custom_call.1} parent=35 // pred_fallthru
          _
        // Predicated region
        $region45: #{tpu_custom_call.1} parent=35 // pred_check
          %p256 = pneg %p102
        $region46: #{tpu_custom_call.1} parent=35 // pred_check_branch
          %258 = sbr.rel (%p256) target = $region48
        $region47: #{tpu_custom_call.1} parent=35 // pred_region
          %260 = dma.done [#allocation7], 4096
        $region48: #{tpu_custom_call.1} parent=35 // pred_fallthru
          _
        %p261 = pneg %p50
        %p262 = pneg %p47
        %s263 = sand.u32 %s22, 1
        %s264 = scalar_lea.sflag [#allocation7], %s263
        %s265 = sand.u32 %s63, 1
        %s266 = smul.addr %s265, 64
        %s267 = scalar_lea.vmem [#allocation6], %s266
        %p268 = pneg %p76
        %p269 = pneg %p73
        %p270 = pneg %p102
        %p271 = pneg %p99
        %p272 = scmp.lt.s32.totalorder %s27, 1
        %s273 = scalar_select %p272, %s27, 1
        %s274 = scalar_lea.vmem %s3, %s273
        %p275 = pneg %p128
        %p276 = pneg %p125
        %p277 = pneg %p156
        %p278 = pneg %p153
        %s279 = sand.u32 %s143, 1
        %s280 = scalar_lea.sflag [#allocation5], %s279
        %s281 = sand.u32 %s143, 1
        %s282 = smul.addr %s281, 256
        %s283 = scalar_lea.vmem [#allocation9], %s282
        %s284 = smul.u32 32, %s26
        %p285 = scmp.lt.s32.totalorder %s27, 1
        %s286 = scalar_select %p285, %s27, 1
        %s287 = scalar_lea.vmem %s3, %s286
        %s288 = smul.u32 32, %s26
        %s289 = smul.u32 %s27, 128
        %p290 = scmp.eq.s32.totalorder %s26, 0
        // Predicated region
        $region49: #{tpu_custom_call.1} parent=35 // pred_check
          %p291 = pneg %p290
        $region50: #{tpu_custom_call.1} parent=35 // pred_check_branch
          %293 = sbr.rel (%p291) target = $region52
        $region51: #{tpu_custom_call.1} parent=35 // pred_region
          %v294 = vld [vmem:[#allocation3] sm:$0xf]
          %v295 = vld [vmem:[#allocation3 + $0x4] sm:$0xf]
          %v296 = vld [vmem:[#allocation3 + $0x8] sm:$0xf]
          %v297 = vld [vmem:[#allocation3 + $0xc] sm:$0xf]
          %v298 = vld [vmem:[#allocation3 + $0x10] sm:$0xf]
          %v299 = vld [vmem:[#allocation3 + $0x14] sm:$0xf]
          %v300 = vld [vmem:[#allocation3 + $0x18] sm:$0xf]
          %v301 = vld [vmem:[#allocation3 + $0x1c] sm:$0xf]
          %v302 = vld [vmem:[#allocation3 + $0x20] sm:$0xf]
          %v303 = vld [vmem:[#allocation3 + $0x24] sm:$0xf]
          %v304 = vld [vmem:[#allocation3 + $0x28] sm:$0xf]
          %v305 = vld [vmem:[#allocation3 + $0x2c] sm:$0xf]
          %v306 = vld [vmem:[#allocation3 + $0x30] sm:$0xf]
          %v307 = vld [vmem:[#allocation3 + $0x34] sm:$0xf]
          %v308 = vld [vmem:[#allocation3 + $0x38] sm:$0xf]
          %v309 = vld [vmem:[#allocation3 + $0x3c] sm:$0xf]
          %v310 = vld [vmem:[#allocation3 + $0x40] sm:$0xf]
          %v311 = vld [vmem:[#allocation3 + $0x44] sm:$0xf]
          %v312 = vld [vmem:[#allocation3 + $0x48] sm:$0xf]
          %v313 = vld [vmem:[#allocation3 + $0x4c] sm:$0xf]
          %v314 = vld [vmem:[#allocation3 + $0x50] sm:$0xf]
          %v315 = vld [vmem:[#allocation3 + $0x54] sm:$0xf]
          %v316 = vld [vmem:[#allocation3 + $0x58] sm:$0xf]
          %v317 = vld [vmem:[#allocation3 + $0x5c] sm:$0xf]
          %v318 = vld [vmem:[#allocation3 + $0x60] sm:$0xf]
          %v319 = vld [vmem:[#allocation3 + $0x64] sm:$0xf]
          %v320 = vld [vmem:[#allocation3 + $0x68] sm:$0xf]
          %v321 = vld [vmem:[#allocation3 + $0x6c] sm:$0xf]
          %v322 = vld [vmem:[#allocation3 + $0x70] sm:$0xf]
          %v323 = vld [vmem:[#allocation3 + $0x74] sm:$0xf]
          %v324 = vld [vmem:[#allocation3 + $0x78] sm:$0xf]
          %v325 = vld [vmem:[#allocation3 + $0x7c] sm:$0xf]
          %v326 = vld [vmem:[%s250] sm:$0xf]
          %v327 = vld [vmem:[%s250 + $0x4] sm:$0xf]
          %v328 = vld [vmem:[%s250 + $0x8] sm:$0xf]
          %v329 = vld [vmem:[%s250 + $0xc] sm:$0xf]
          %v330 = vld [vmem:[%s250 + $0x10] sm:$0xf]
          %v331 = vld [vmem:[%s250 + $0x14] sm:$0xf]
          %v332 = vld [vmem:[%s250 + $0x18] sm:$0xf]
          %v333 = vld [vmem:[%s250 + $0x1c] sm:$0xf]
          %v334 = vld [vmem:[%s250 + $0x20] sm:$0xf]
          %v335 = vld [vmem:[%s250 + $0x24] sm:$0xf]
          %v336 = vld [vmem:[%s250 + $0x28] sm:$0xf]
          %v337 = vld [vmem:[%s250 + $0x2c] sm:$0xf]
          %v338 = vld [vmem:[%s250 + $0x30] sm:$0xf]
          %v339 = vld [vmem:[%s250 + $0x34] sm:$0xf]
          %v340 = vld [vmem:[%s250 + $0x38] sm:$0xf]
          %v341 = vld [vmem:[%s250 + $0x3c] sm:$0xf]
          %v374 = vunpack.c.l.b16 %v294
          %v375 = vunpack.c.l.b16 %v295
          %v376 = vunpack.c.l.b16 %v296
          %v377 = vunpack.c.l.b16 %v297
          %v378 = vunpack.c.l.b16 %v298
          %v379 = vunpack.c.l.b16 %v299
          %v380 = vunpack.c.l.b16 %v300
          %v381 = vunpack.c.l.b16 %v301
          %v382 = vunpack.c.l.b16 %v302
          %v383 = vunpack.c.l.b16 %v303
          %v384 = vunpack.c.l.b16 %v304
          %v385 = vunpack.c.l.b16 %v305
          %v386 = vunpack.c.l.b16 %v306
          %v387 = vunpack.c.l.b16 %v307
          %v388 = vunpack.c.l.b16 %v308
          %v389 = vunpack.c.l.b16 %v309
          %v390 = vunpack.c.l.b16 %v310
          %v391 = vunpack.c.l.b16 %v311
          %v392 = vunpack.c.l.b16 %v312
          %v393 = vunpack.c.l.b16 %v313
          %v394 = vunpack.c.l.b16 %v314
          %v395 = vunpack.c.l.b16 %v315
          %v396 = vunpack.c.l.b16 %v316
          %v397 = vunpack.c.l.b16 %v317
          %v398 = vunpack.c.l.b16 %v318
          %v399 = vunpack.c.l.b16 %v319
          %v400 = vunpack.c.l.b16 %v320
          %v401 = vunpack.c.l.b16 %v321
          %v402 = vunpack.c.l.b16 %v322
          %v403 = vunpack.c.l.b16 %v323
          %v404 = vunpack.c.l.b16 %v324
          %v405 = vunpack.c.l.b16 %v325
          %v406 = vpack.c.b16 %v375, %v374
          %v407 = vpack.c.b16 %v377, %v376
          %v408 = vpack.c.b16 %v379, %v378
          %v409 = vpack.c.b16 %v381, %v380
          %v410 = vpack.c.b16 %v383, %v382
          %v411 = vpack.c.b16 %v385, %v384
          %v412 = vpack.c.b16 %v387, %v386
          %v413 = vpack.c.b16 %v389, %v388
          %v414 = vpack.c.b16 %v391, %v390
          %v415 = vpack.c.b16 %v393, %v392
          %v416 = vpack.c.b16 %v395, %v394
          %v417 = vpack.c.b16 %v397, %v396
          %v418 = vpack.c.b16 %v399, %v398
          %v419 = vpack.c.b16 %v401, %v400
          %v420 = vpack.c.b16 %v403, %v402
          %v421 = vpack.c.b16 %v405, %v404
          %v454 = vunpack.c.l.b16 %v326
          %v455 = vunpack.c.l.b16 %v327
          %v456 = vunpack.c.l.b16 %v328
          %v457 = vunpack.c.l.b16 %v329
          %v458 = vunpack.c.l.b16 %v330
          %v459 = vunpack.c.l.b16 %v331
          %v460 = vunpack.c.l.b16 %v332
          %v461 = vunpack.c.l.b16 %v333
          %v462 = vunpack.c.l.b16 %v334
          %v463 = vunpack.c.l.b16 %v335
          %v464 = vunpack.c.l.b16 %v336
          %v465 = vunpack.c.l.b16 %v337
          %v466 = vunpack.c.l.b16 %v338
          %v467 = vunpack.c.l.b16 %v339
          %v468 = vunpack.c.l.b16 %v340
          %v469 = vunpack.c.l.b16 %v341
          %v470 = vpack.c.b16 %v455, %v454
          %v471 = vpack.c.b16 %v457, %v456
          %v472 = vpack.c.b16 %v459, %v458
          %v473 = vpack.c.b16 %v461, %v460
          %v474 = vpack.c.b16 %v463, %v462
          %v475 = vpack.c.b16 %v465, %v464
          %v476 = vpack.c.b16 %v467, %v466
          %v477 = vpack.c.b16 %v469, %v468
          %486 = vmatpush.bf16.msra.mxu0 %v477
          %487 = vmatpush.bf16.msra.mxu0 %v476
          %488 = vmatpush.bf16.msra.mxu0 %v475
          %489 = vmatpush.bf16.msra.mxu0 %v474
          %490 = vmatpush.bf16.msra.mxu0 %v473
          %491 = vmatpush.bf16.msra.mxu0 %v472
          %492 = vmatpush.bf16.msra.mxu0 %v471
          %493 = vmatpush.bf16.msra.mxu0 %v470
          %494 = vmatmul.bf16.gmra.mxu0 %v406
          %v495 = vpop.f32.mrf.mxu0
          %v496 = vadd.f32 0.0, %v495
          %v497 = vpop.f32.mrf.mxu0
          %v498 = vadd.f32 0.0, %v497
          %499 = vmatmul.bf16.gmra.mxu0 %v407
          %v500 = vpop.f32.mrf.mxu0
          %v501 = vadd.f32 0.0, %v500
          %v502 = vpop.f32.mrf.mxu0
          %v503 = vadd.f32 0.0, %v502
          %504 = vmatmul.bf16.gmra.mxu0 %v408
          %v505 = vpop.f32.mrf.mxu0
          %v506 = vadd.f32 0.0, %v505
          %v507 = vpop.f32.mrf.mxu0
          %v508 = vadd.f32 0.0, %v507
          %509 = vmatmul.bf16.gmra.mxu0 %v409
          %v510 = vpop.f32.mrf.mxu0
          %v511 = vadd.f32 0.0, %v510
          %v512 = vpop.f32.mrf.mxu0
          %v513 = vadd.f32 0.0, %v512
          %514 = vmatmul.bf16.gmra.mxu0 %v410
          %v515 = vpop.f32.mrf.mxu0
          %v516 = vadd.f32 0.0, %v515
          %v517 = vpop.f32.mrf.mxu0
          %v518 = vadd.f32 0.0, %v517
          %519 = vmatmul.bf16.gmra.mxu0 %v411
          %v520 = vpop.f32.mrf.mxu0
          %v521 = vadd.f32 0.0, %v520
          %v522 = vpop.f32.mrf.mxu0
          %v523 = vadd.f32 0.0, %v522
          %524 = vmatmul.bf16.gmra.mxu0 %v412
          %v525 = vpop.f32.mrf.mxu0
          %v526 = vadd.f32 0.0, %v525
          %v527 = vpop.f32.mrf.mxu0
          %v528 = vadd.f32 0.0, %v527
          %529 = vmatmul.bf16.gmra.mxu0 %v413
          %v530 = vpop.f32.mrf.mxu0
          %v531 = vadd.f32 0.0, %v530
          %v532 = vpop.f32.mrf.mxu0
          %v533 = vadd.f32 0.0, %v532
          %534 = vmatmul.bf16.gmra.mxu0 %v414
          %v535 = vpop.f32.mrf.mxu0
          %v536 = vadd.f32 0.0, %v535
          %v537 = vpop.f32.mrf.mxu0
          %v538 = vadd.f32 0.0, %v537
          %539 = vmatmul.bf16.gmra.mxu0 %v415
          %v540 = vpop.f32.mrf.mxu0
          %v541 = vadd.f32 0.0, %v540
          %v542 = vpop.f32.mrf.mxu0
          %v543 = vadd.f32 0.0, %v542
          %544 = vmatmul.bf16.gmra.mxu0 %v416
          %v545 = vpop.f32.mrf.mxu0
          %v546 = vadd.f32 0.0, %v545
          %v547 = vpop.f32.mrf.mxu0
          %v548 = vadd.f32 0.0, %v547
          %549 = vmatmul.bf16.gmra.mxu0 %v417
          %v550 = vpop.f32.mrf.mxu0
          %v551 = vadd.f32 0.0, %v550
          %v552 = vpop.f32.mrf.mxu0
          %v553 = vadd.f32 0.0, %v552
          %554 = vmatmul.bf16.gmra.mxu0 %v418
          %v555 = vpop.f32.mrf.mxu0
          %v556 = vadd.f32 0.0, %v555
          %v557 = vpop.f32.mrf.mxu0
          %v558 = vadd.f32 0.0, %v557
          %559 = vmatmul.bf16.gmra.mxu0 %v419
          %v560 = vpop.f32.mrf.mxu0
          %v561 = vadd.f32 0.0, %v560
          %v562 = vpop.f32.mrf.mxu0
          %v563 = vadd.f32 0.0, %v562
          %564 = vmatmul.bf16.gmra.mxu0 %v420
          %v565 = vpop.f32.mrf.mxu0
          %v566 = vadd.f32 0.0, %v565
          %v567 = vpop.f32.mrf.mxu0
          %v568 = vadd.f32 0.0, %v567
          %569 = vmatmul.bf16.gmra.mxu0 %v421
          %v570 = vpop.f32.mrf.mxu0
          %v571 = vadd.f32 0.0, %v570
          %v572 = vpop.f32.mrf.mxu0
          %v573 = vadd.f32 0.0, %v572
          %574 = vdwg.mxu0
          %v575 = vpack.c.bf16 %v496, %v496
          %v576 = vpack.c.bf16 %v498, %v498
          %v577 = vpack.c.bf16 %v501, %v501
          %v578 = vpack.c.bf16 %v503, %v503
          %v579 = vpack.c.bf16 %v506, %v506
          %v580 = vpack.c.bf16 %v508, %v508
          %v581 = vpack.c.bf16 %v511, %v511
          %v582 = vpack.c.bf16 %v513, %v513
          %v583 = vpack.c.bf16 %v516, %v516
          %v584 = vpack.c.bf16 %v518, %v518
          %v585 = vpack.c.bf16 %v521, %v521
          %v586 = vpack.c.bf16 %v523, %v523
          %v587 = vpack.c.bf16 %v526, %v526
          %v588 = vpack.c.bf16 %v528, %v528
          %v589 = vpack.c.bf16 %v531, %v531
          %v590 = vpack.c.bf16 %v533, %v533
          %v591 = vpack.c.bf16 %v536, %v536
          %v592 = vpack.c.bf16 %v538, %v538
          %v593 = vpack.c.bf16 %v541, %v541
          %v594 = vpack.c.bf16 %v543, %v543
          %v595 = vpack.c.bf16 %v546, %v546
          %v596 = vpack.c.bf16 %v548, %v548
          %v597 = vpack.c.bf16 %v551, %v551
          %v598 = vpack.c.bf16 %v553, %v553
          %v599 = vpack.c.bf16 %v556, %v556
          %v600 = vpack.c.bf16 %v558, %v558
          %v601 = vpack.c.bf16 %v561, %v561
          %v602 = vpack.c.bf16 %v563, %v563
          %v603 = vpack.c.bf16 %v566, %v566
          %v604 = vpack.c.bf16 %v568, %v568
          %v605 = vpack.c.bf16 %v571, %v571
          %v606 = vpack.c.bf16 %v573, %v573
          %s607 = sshra.s32 %s289, 7
          %s608 = sand.u32 %s289, 127
          %s609 = smul.addr %s607, 4
          %s610 = scalar_lea.vmem [#allocation2], %s609
          %611 = vst [vmem:[%s610] sm:$0xf] %v575
          %612 = vst [vmem:[%s610 + $0x8] sm:$0xf] %v576
          %613 = vst [vmem:[%s610 + $0x10] sm:$0xf] %v577
          %614 = vst [vmem:[%s610 + $0x18] sm:$0xf] %v578
          %615 = vst [vmem:[%s610 + $0x20] sm:$0xf] %v579
          %616 = vst [vmem:[%s610 + $0x28] sm:$0xf] %v580
          %617 = vst [vmem:[%s610 + $0x30] sm:$0xf] %v581
          %618 = vst [vmem:[%s610 + $0x38] sm:$0xf] %v582
          %619 = vst [vmem:[%s610 + $0x40] sm:$0xf] %v583
          %620 = vst [vmem:[%s610 + $0x48] sm:$0xf] %v584
          %621 = vst [vmem:[%s610 + $0x50] sm:$0xf] %v585
          %622 = vst [vmem:[%s610 + $0x58] sm:$0xf] %v586
          %623 = vst [vmem:[%s610 + $0x60] sm:$0xf] %v587
          %624 = vst [vmem:[%s610 + $0x68] sm:$0xf] %v588
          %625 = vst [vmem:[%s610 + $0x70] sm:$0xf] %v589
          %626 = vst [vmem:[%s610 + $0x78] sm:$0xf] %v590
          %627 = vst [vmem:[%s610 + $0x80] sm:$0xf] %v591
          %628 = vst [vmem:[%s610 + $0x88] sm:$0xf] %v592
          %629 = vst [vmem:[%s610 + $0x90] sm:$0xf] %v593
          %630 = vst [vmem:[%s610 + $0x98] sm:$0xf] %v594
          %631 = vst [vmem:[%s610 + $0xa0] sm:$0xf] %v595
          %632 = vst [vmem:[%s610 + $0xa8] sm:$0xf] %v596
          %633 = vst [vmem:[%s610 + $0xb0] sm:$0xf] %v597
          %634 = vst [vmem:[%s610 + $0xb8] sm:$0xf] %v598
          %635 = vst [vmem:[%s610 + $0xc0] sm:$0xf] %v599
          %636 = vst [vmem:[%s610 + $0xc8] sm:$0xf] %v600
          %637 = vst [vmem:[%s610 + $0xd0] sm:$0xf] %v601
          %638 = vst [vmem:[%s610 + $0xd8] sm:$0xf] %v602
          %639 = vst [vmem:[%s610 + $0xe0] sm:$0xf] %v603
          %640 = vst [vmem:[%s610 + $0xe8] sm:$0xf] %v604
          %641 = vst [vmem:[%s610 + $0xf0] sm:$0xf] %v605
          %642 = vst [vmem:[%s610 + $0xf8] sm:$0xf] %v606
        $region52: #{tpu_custom_call.1} parent=35 // pred_fallthru
          _
        %v643 = vld [vmem:[#allocation8] sm:$0xff]
        %v644 = vld [vmem:[#allocation8 + $0x8] sm:$0xff]
        %v645 = vld [vmem:[#allocation8 + $0x10] sm:$0xff]
        %v646 = vld [vmem:[#allocation8 + $0x18] sm:$0xff]
        %v647 = vld [vmem:[#allocation8 + $0x20] sm:$0xff]
        %v648 = vld [vmem:[#allocation8 + $0x28] sm:$0xff]
        %v649 = vld [vmem:[#allocation8 + $0x30] sm:$0xff]
        %v650 = vld [vmem:[#allocation8 + $0x38] sm:$0xff]
        %v651 = vld [vmem:[#allocation8 + $0x40] sm:$0xff]
        %v652 = vld [vmem:[#allocation8 + $0x48] sm:$0xff]
        %v653 = vld [vmem:[#allocation8 + $0x50] sm:$0xff]
        %v654 = vld [vmem:[#allocation8 + $0x58] sm:$0xff]
        %v655 = vld [vmem:[#allocation8 + $0x60] sm:$0xff]
        %v656 = vld [vmem:[#allocation8 + $0x68] sm:$0xff]
        %v657 = vld [vmem:[#allocation8 + $0x70] sm:$0xff]
        %v658 = vld [vmem:[#allocation8 + $0x78] sm:$0xff]
        %v659 = vld [vmem:[#allocation8 + $0x80] sm:$0xff]
        %v660 = vld [vmem:[#allocation8 + $0x88] sm:$0xff]
        %v661 = vld [vmem:[#allocation8 + $0x90] sm:$0xff]
        %v662 = vld [vmem:[#allocation8 + $0x98] sm:$0xff]
        %v663 = vld [vmem:[#allocation8 + $0xa0] sm:$0xff]
        %v664 = vld [vmem:[#allocation8 + $0xa8] sm:$0xff]
        %v665 = vld [vmem:[#allocation8 + $0xb0] sm:$0xff]
        %v666 = vld [vmem:[#allocation8 + $0xb8] sm:$0xff]
        %v667 = vld [vmem:[#allocation8 + $0xc0] sm:$0xff]
        %v668 = vld [vmem:[#allocation8 + $0xc8] sm:$0xff]
        %v669 = vld [vmem:[#allocation8 + $0xd0] sm:$0xff]
        %v670 = vld [vmem:[#allocation8 + $0xd8] sm:$0xff]
        %v671 = vld [vmem:[#allocation8 + $0xe0] sm:$0xff]
        %v672 = vld [vmem:[#allocation8 + $0xe8] sm:$0xff]
        %v673 = vld [vmem:[#allocation8 + $0xf0] sm:$0xff]
        %v674 = vld [vmem:[#allocation8 + $0xf8] sm:$0xff]
        %s675 = sshra.s32 %s289, 7
        %s676 = sand.u32 %s289, 127
        %s677 = smul.addr %s675, 4
        %s678 = scalar_lea.vmem [#allocation2], %s677
        %v679 = vld [vmem:[%s678] sm:$0xf]
        %v680 = vld [vmem:[%s678 + $0x8] sm:$0xf]
        %v681 = vld [vmem:[%s678 + $0x10] sm:$0xf]
        %v682 = vld [vmem:[%s678 + $0x18] sm:$0xf]
        %v683 = vld [vmem:[%s678 + $0x20] sm:$0xf]
        %v684 = vld [vmem:[%s678 + $0x28] sm:$0xf]
        %v685 = vld [vmem:[%s678 + $0x30] sm:$0xf]
        %v686 = vld [vmem:[%s678 + $0x38] sm:$0xf]
        %v687 = vld [vmem:[%s678 + $0x40] sm:$0xf]
        %v688 = vld [vmem:[%s678 + $0x48] sm:$0xf]
        %v689 = vld [vmem:[%s678 + $0x50] sm:$0xf]
        %v690 = vld [vmem:[%s678 + $0x58] sm:$0xf]
        %v691 = vld [vmem:[%s678 + $0x60] sm:$0xf]
        %v692 = vld [vmem:[%s678 + $0x68] sm:$0xf]
        %v693 = vld [vmem:[%s678 + $0x70] sm:$0xf]
        %v694 = vld [vmem:[%s678 + $0x78] sm:$0xf]
        %v695 = vld [vmem:[%s678 + $0x80] sm:$0xf]
        %v696 = vld [vmem:[%s678 + $0x88] sm:$0xf]
        %v697 = vld [vmem:[%s678 + $0x90] sm:$0xf]
        %v698 = vld [vmem:[%s678 + $0x98] sm:$0xf]
        %v699 = vld [vmem:[%s678 + $0xa0] sm:$0xf]
        %v700 = vld [vmem:[%s678 + $0xa8] sm:$0xf]
        %v701 = vld [vmem:[%s678 + $0xb0] sm:$0xf]
        %v702 = vld [vmem:[%s678 + $0xb8] sm:$0xf]
        %v703 = vld [vmem:[%s678 + $0xc0] sm:$0xf]
        %v704 = vld [vmem:[%s678 + $0xc8] sm:$0xf]
        %v705 = vld [vmem:[%s678 + $0xd0] sm:$0xf]
        %v706 = vld [vmem:[%s678 + $0xd8] sm:$0xf]
        %v707 = vld [vmem:[%s678 + $0xe0] sm:$0xf]
        %v708 = vld [vmem:[%s678 + $0xe8] sm:$0xf]
        %v709 = vld [vmem:[%s678 + $0xf0] sm:$0xf]
        %v710 = vld [vmem:[%s678 + $0xf8] sm:$0xf]
        %v711 = vld [vmem:[%s287] sm:$0x1]
        %v713 = vperm.slane %v711, 0
        %v747 = vunpack.c.l.b16 %v643
        %v748 = vunpack.c.h.b16 %v643
        %v749 = vunpack.c.l.b16 %v644
        %v750 = vunpack.c.h.b16 %v644
        %v751 = vunpack.c.l.b16 %v645
        %v752 = vunpack.c.h.b16 %v645
        %v753 = vunpack.c.l.b16 %v646
        %v754 = vunpack.c.h.b16 %v646
        %v755 = vunpack.c.l.b16 %v647
        %v756 = vunpack.c.h.b16 %v647
        %v757 = vunpack.c.l.b16 %v648
        %v758 = vunpack.c.h.b16 %v648
        %v759 = vunpack.c.l.b16 %v649
        %v760 = vunpack.c.h.b16 %v649
        %v761 = vunpack.c.l.b16 %v650
        %v762 = vunpack.c.h.b16 %v650
        %v763 = vunpack.c.l.b16 %v651
        %v764 = vunpack.c.h.b16 %v651
        %v765 = vunpack.c.l.b16 %v652
        %v766 = vunpack.c.h.b16 %v652
        %v767 = vunpack.c.l.b16 %v653
        %v768 = vunpack.c.h.b16 %v653
        %v769 = vunpack.c.l.b16 %v654
        %v770 = vunpack.c.h.b16 %v654
        %v771 = vunpack.c.l.b16 %v655
        %v772 = vunpack.c.h.b16 %v655
        %v773 = vunpack.c.l.b16 %v656
        %v774 = vunpack.c.h.b16 %v656
        %v775 = vunpack.c.l.b16 %v657
        %v776 = vunpack.c.h.b16 %v657
        %v777 = vunpack.c.l.b16 %v658
        %v778 = vunpack.c.h.b16 %v658
        %v779 = vunpack.c.l.b16 %v659
        %v780 = vunpack.c.h.b16 %v659
        %v781 = vunpack.c.l.b16 %v660
        %v782 = vunpack.c.h.b16 %v660
        %v783 = vunpack.c.l.b16 %v661
        %v784 = vunpack.c.h.b16 %v661
        %v785 = vunpack.c.l.b16 %v662
        %v786 = vunpack.c.h.b16 %v662
        %v787 = vunpack.c.l.b16 %v663
        %v788 = vunpack.c.h.b16 %v663
        %v789 = vunpack.c.l.b16 %v664
        %v790 = vunpack.c.h.b16 %v664
        %v791 = vunpack.c.l.b16 %v665
        %v792 = vunpack.c.h.b16 %v665
        %v793 = vunpack.c.l.b16 %v666
        %v794 = vunpack.c.h.b16 %v666
        %v795 = vunpack.c.l.b16 %v667
        %v796 = vunpack.c.h.b16 %v667
        %v797 = vunpack.c.l.b16 %v668
        %v798 = vunpack.c.h.b16 %v668
        %v799 = vunpack.c.l.b16 %v669
        %v800 = vunpack.c.h.b16 %v669
        %v801 = vunpack.c.l.b16 %v670
        %v802 = vunpack.c.h.b16 %v670
        %v803 = vunpack.c.l.b16 %v671
        %v804 = vunpack.c.h.b16 %v671
        %v805 = vunpack.c.l.b16 %v672
        %v806 = vunpack.c.h.b16 %v672
        %v807 = vunpack.c.l.b16 %v673
        %v808 = vunpack.c.h.b16 %v673
        %v809 = vunpack.c.l.b16 %v674
        %v810 = vunpack.c.h.b16 %v674
        %v811 = vpack.c.b16 %v749, %v747
        %v812 = vpack.c.b16 %v750, %v748
        %v813 = vpack.c.b16 %v753, %v751
        %v814 = vpack.c.b16 %v754, %v752
        %v815 = vpack.c.b16 %v757, %v755
        %v816 = vpack.c.b16 %v758, %v756
        %v817 = vpack.c.b16 %v761, %v759
        %v818 = vpack.c.b16 %v762, %v760
        %v819 = vpack.c.b16 %v765, %v763
        %v820 = vpack.c.b16 %v766, %v764
        %v821 = vpack.c.b16 %v769, %v767
        %v822 = vpack.c.b16 %v770, %v768
        %v823 = vpack.c.b16 %v773, %v771
        %v824 = vpack.c.b16 %v774, %v772
        %v825 = vpack.c.b16 %v777, %v775
        %v826 = vpack.c.b16 %v778, %v776
        %v827 = vpack.c.b16 %v781, %v779
        %v828 = vpack.c.b16 %v782, %v780
        %v829 = vpack.c.b16 %v785, %v783
        %v830 = vpack.c.b16 %v786, %v784
        %v831 = vpack.c.b16 %v789, %v787
        %v832 = vpack.c.b16 %v790, %v788
        %v833 = vpack.c.b16 %v793, %v791
        %v834 = vpack.c.b16 %v794, %v792
        %v835 = vpack.c.b16 %v797, %v795
        %v836 = vpack.c.b16 %v798, %v796
        %v837 = vpack.c.b16 %v801, %v799
        %v838 = vpack.c.b16 %v802, %v800
        %v839 = vpack.c.b16 %v805, %v803
        %v840 = vpack.c.b16 %v806, %v804
        %v841 = vpack.c.b16 %v809, %v807
        %v842 = vpack.c.b16 %v810, %v808
        %v907 = vunpack.c.l.b16 %v679
        %v908 = vunpack.c.l.b16 %v680
        %v909 = vunpack.c.l.b16 %v681
        %v910 = vunpack.c.l.b16 %v682
        %v911 = vunpack.c.l.b16 %v683
        %v912 = vunpack.c.l.b16 %v684
        %v913 = vunpack.c.l.b16 %v685
        %v914 = vunpack.c.l.b16 %v686
        %v915 = vunpack.c.l.b16 %v687
        %v916 = vunpack.c.l.b16 %v688
        %v917 = vunpack.c.l.b16 %v689
        %v918 = vunpack.c.l.b16 %v690
        %v919 = vunpack.c.l.b16 %v691
        %v920 = vunpack.c.l.b16 %v692
        %v921 = vunpack.c.l.b16 %v693
        %v922 = vunpack.c.l.b16 %v694
        %v923 = vunpack.c.l.b16 %v695
        %v924 = vunpack.c.l.b16 %v696
        %v925 = vunpack.c.l.b16 %v697
        %v926 = vunpack.c.l.b16 %v698
        %v927 = vunpack.c.l.b16 %v699
        %v928 = vunpack.c.l.b16 %v700
        %v929 = vunpack.c.l.b16 %v701
        %v930 = vunpack.c.l.b16 %v702
        %v931 = vunpack.c.l.b16 %v703
        %v932 = vunpack.c.l.b16 %v704
        %v933 = vunpack.c.l.b16 %v705
        %v934 = vunpack.c.l.b16 %v706
        %v935 = vunpack.c.l.b16 %v707
        %v936 = vunpack.c.l.b16 %v708
        %v937 = vunpack.c.l.b16 %v709
        %v938 = vunpack.c.l.b16 %v710
        %v939 = vpack.c.b16 %v908, %v907
        %v940 = vpack.c.b16 %v910, %v909
        %v941 = vpack.c.b16 %v912, %v911
        %v942 = vpack.c.b16 %v914, %v913
        %v943 = vpack.c.b16 %v916, %v915
        %v944 = vpack.c.b16 %v918, %v917
        %v945 = vpack.c.b16 %v920, %v919
        %v946 = vpack.c.b16 %v922, %v921
        %v947 = vpack.c.b16 %v924, %v923
        %v948 = vpack.c.b16 %v926, %v925
        %v949 = vpack.c.b16 %v928, %v927
        %v950 = vpack.c.b16 %v930, %v929
        %v951 = vpack.c.b16 %v932, %v931
        %v952 = vpack.c.b16 %v934, %v933
        %v953 = vpack.c.b16 %v936, %v935
        %v954 = vpack.c.b16 %v938, %v937
        %971 = vmatpush.bf16.msra.mxu0 %v946
        %972 = vmatpush.bf16.msra.mxu0 %v945
        %973 = vmatpush.bf16.msra.mxu0 %v944
        %974 = vmatpush.bf16.msra.mxu0 %v943
        %975 = vmatpush.bf16.msra.mxu0 %v942
        %976 = vmatpush.bf16.msra.mxu0 %v941
        %977 = vmatpush.bf16.msra.mxu0 %v940
        %978 = vmatpush.bf16.msra.mxu0 %v939
        %979 = vmatmul.bf16.gmra.mxu0 %v811
        %v980 = vpop.f32.mrf.mxu0
        %v981 = vadd.f32 %v713, %v980
        %v982 = vpop.f32.mrf.mxu0
        %v983 = vadd.f32 %v713, %v982
        %984 = vmatmul.bf16.gmra.mxu0 %v813
        %v985 = vpop.f32.mrf.mxu0
        %v986 = vadd.f32 %v713, %v985
        %v987 = vpop.f32.mrf.mxu0
        %v988 = vadd.f32 %v713, %v987
        %989 = vmatmul.bf16.gmra.mxu0 %v815
        %v990 = vpop.f32.mrf.mxu0
        %v991 = vadd.f32 %v713, %v990
        %v992 = vpop.f32.mrf.mxu0
        %v993 = vadd.f32 %v713, %v992
        %994 = vmatmul.bf16.gmra.mxu0 %v817
        %v995 = vpop.f32.mrf.mxu0
        %v996 = vadd.f32 %v713, %v995
        %v997 = vpop.f32.mrf.mxu0
        %v998 = vadd.f32 %v713, %v997
        %999 = vmatmul.bf16.gmra.mxu0 %v819
        %v1000 = vpop.f32.mrf.mxu0
        %v1001 = vadd.f32 %v713, %v1000
        %v1002 = vpop.f32.mrf.mxu0
        %v1003 = vadd.f32 %v713, %v1002
        %1004 = vmatmul.bf16.gmra.mxu0 %v821
        %v1005 = vpop.f32.mrf.mxu0
        %v1006 = vadd.f32 %v713, %v1005
        %v1007 = vpop.f32.mrf.mxu0
        %v1008 = vadd.f32 %v713, %v1007
        %1009 = vmatmul.bf16.gmra.mxu0 %v823
        %v1010 = vpop.f32.mrf.mxu0
        %v1011 = vadd.f32 %v713, %v1010
        %v1012 = vpop.f32.mrf.mxu0
        %v1013 = vadd.f32 %v713, %v1012
        %1014 = vmatmul.bf16.gmra.mxu0 %v825
        %v1015 = vpop.f32.mrf.mxu0
        %v1016 = vadd.f32 %v713, %v1015
        %v1017 = vpop.f32.mrf.mxu0
        %v1018 = vadd.f32 %v713, %v1017
        %1019 = vmatmul.bf16.gmra.mxu0 %v827
        %v1020 = vpop.f32.mrf.mxu0
        %v1021 = vadd.f32 %v713, %v1020
        %v1022 = vpop.f32.mrf.mxu0
        %v1023 = vadd.f32 %v713, %v1022
        %1024 = vmatmul.bf16.gmra.mxu0 %v829
        %v1025 = vpop.f32.mrf.mxu0
        %v1026 = vadd.f32 %v713, %v1025
        %v1027 = vpop.f32.mrf.mxu0
        %v1028 = vadd.f32 %v713, %v1027
        %1029 = vmatmul.bf16.gmra.mxu0 %v831
        %v1030 = vpop.f32.mrf.mxu0
        %v1031 = vadd.f32 %v713, %v1030
        %v1032 = vpop.f32.mrf.mxu0
        %v1033 = vadd.f32 %v713, %v1032
        %1034 = vmatmul.bf16.gmra.mxu0 %v833
        %v1035 = vpop.f32.mrf.mxu0
        %v1036 = vadd.f32 %v713, %v1035
        %v1037 = vpop.f32.mrf.mxu0
        %v1038 = vadd.f32 %v713, %v1037
        %1039 = vmatmul.bf16.gmra.mxu0 %v835
        %v1040 = vpop.f32.mrf.mxu0
        %v1041 = vadd.f32 %v713, %v1040
        %v1042 = vpop.f32.mrf.mxu0
        %v1043 = vadd.f32 %v713, %v1042
        %1044 = vmatmul.bf16.gmra.mxu0 %v837
        %v1045 = vpop.f32.mrf.mxu0
        %v1046 = vadd.f32 %v713, %v1045
        %v1047 = vpop.f32.mrf.mxu0
        %v1048 = vadd.f32 %v713, %v1047
        %1049 = vmatmul.bf16.gmra.mxu0 %v839
        %v1050 = vpop.f32.mrf.mxu0
        %v1051 = vadd.f32 %v713, %v1050
        %v1052 = vpop.f32.mrf.mxu0
        %v1053 = vadd.f32 %v713, %v1052
        %1054 = vmatmul.bf16.gmra.mxu0 %v841
        %v1055 = vpop.f32.mrf.mxu0
        %v1056 = vadd.f32 %v713, %v1055
        %v1057 = vpop.f32.mrf.mxu0
        %v1058 = vadd.f32 %v713, %v1057
        %1059 = vdwg.mxu0
        %1060 = vmatpush.bf16.msra.mxu0 %v954
        %1061 = vmatpush.bf16.msra.mxu0 %v953
        %1062 = vmatpush.bf16.msra.mxu0 %v952
        %1063 = vmatpush.bf16.msra.mxu0 %v951
        %1064 = vmatpush.bf16.msra.mxu0 %v950
        %1065 = vmatpush.bf16.msra.mxu0 %v949
        %1066 = vmatpush.bf16.msra.mxu0 %v948
        %1067 = vmatpush.bf16.msra.mxu0 %v947
        %1068 = vmatmul.bf16.gmra.mxu0 %v812
        %v1069 = vpop.f32.mrf.mxu0
        %v1070 = vadd.f32 %v981, %v1069
        %v1071 = vpop.f32.mrf.mxu0
        %v1072 = vadd.f32 %v983, %v1071
        %1073 = vmatmul.bf16.gmra.mxu0 %v814
        %v1074 = vpop.f32.mrf.mxu0
        %v1075 = vadd.f32 %v986, %v1074
        %v1076 = vpop.f32.mrf.mxu0
        %v1077 = vadd.f32 %v988, %v1076
        %1078 = vmatmul.bf16.gmra.mxu0 %v816
        %v1079 = vpop.f32.mrf.mxu0
        %v1080 = vadd.f32 %v991, %v1079
        %v1081 = vpop.f32.mrf.mxu0
        %v1082 = vadd.f32 %v993, %v1081
        %1083 = vmatmul.bf16.gmra.mxu0 %v818
        %v1084 = vpop.f32.mrf.mxu0
        %v1085 = vadd.f32 %v996, %v1084
        %v1086 = vpop.f32.mrf.mxu0
        %v1087 = vadd.f32 %v998, %v1086
        %1088 = vmatmul.bf16.gmra.mxu0 %v820
        %v1089 = vpop.f32.mrf.mxu0
        %v1090 = vadd.f32 %v1001, %v1089
        %v1091 = vpop.f32.mrf.mxu0
        %v1092 = vadd.f32 %v1003, %v1091
        %1093 = vmatmul.bf16.gmra.mxu0 %v822
        %v1094 = vpop.f32.mrf.mxu0
        %v1095 = vadd.f32 %v1006, %v1094
        %v1096 = vpop.f32.mrf.mxu0
        %v1097 = vadd.f32 %v1008, %v1096
        %1098 = vmatmul.bf16.gmra.mxu0 %v824
        %v1099 = vpop.f32.mrf.mxu0
        %v1100 = vadd.f32 %v1011, %v1099
        %v1101 = vpop.f32.mrf.mxu0
        %v1102 = vadd.f32 %v1013, %v1101
        %1103 = vmatmul.bf16.gmra.mxu0 %v826
        %v1104 = vpop.f32.mrf.mxu0
        %v1105 = vadd.f32 %v1016, %v1104
        %v1106 = vpop.f32.mrf.mxu0
        %v1107 = vadd.f32 %v1018, %v1106
        %1108 = vmatmul.bf16.gmra.mxu0 %v828
        %v1109 = vpop.f32.mrf.mxu0
        %v1110 = vadd.f32 %v1021, %v1109
        %v1111 = vpop.f32.mrf.mxu0
        %v1112 = vadd.f32 %v1023, %v1111
        %1113 = vmatmul.bf16.gmra.mxu0 %v830
        %v1114 = vpop.f32.mrf.mxu0
        %v1115 = vadd.f32 %v1026, %v1114
        %v1116 = vpop.f32.mrf.mxu0
        %v1117 = vadd.f32 %v1028, %v1116
        %1118 = vmatmul.bf16.gmra.mxu0 %v832
        %v1119 = vpop.f32.mrf.mxu0
        %v1120 = vadd.f32 %v1031, %v1119
        %v1121 = vpop.f32.mrf.mxu0
        %v1122 = vadd.f32 %v1033, %v1121
        %1123 = vmatmul.bf16.gmra.mxu0 %v834
        %v1124 = vpop.f32.mrf.mxu0
        %v1125 = vadd.f32 %v1036, %v1124
        %v1126 = vpop.f32.mrf.mxu0
        %v1127 = vadd.f32 %v1038, %v1126
        %1128 = vmatmul.bf16.gmra.mxu0 %v836
        %v1129 = vpop.f32.mrf.mxu0
        %v1130 = vadd.f32 %v1041, %v1129
        %v1131 = vpop.f32.mrf.mxu0
        %v1132 = vadd.f32 %v1043, %v1131
        %1133 = vmatmul.bf16.gmra.mxu0 %v838
        %v1134 = vpop.f32.mrf.mxu0
        %v1135 = vadd.f32 %v1046, %v1134
        %v1136 = vpop.f32.mrf.mxu0
        %v1137 = vadd.f32 %v1048, %v1136
        %1138 = vmatmul.bf16.gmra.mxu0 %v840
        %v1139 = vpop.f32.mrf.mxu0
        %v1140 = vadd.f32 %v1051, %v1139
        %v1141 = vpop.f32.mrf.mxu0
        %v1142 = vadd.f32 %v1053, %v1141
        %1143 = vmatmul.bf16.gmra.mxu0 %v842
        %v1144 = vpop.f32.mrf.mxu0
        %v1145 = vadd.f32 %v1056, %v1144
        %v1146 = vpop.f32.mrf.mxu0
        %v1147 = vadd.f32 %v1058, %v1146
        %1148 = vdwg.mxu0
        %1149 = vst [vmem:[%s283] sm:$0xff] %v1070
        %1150 = vst [vmem:[%s283 + $0x8] sm:$0xff] %v1072
        %1151 = vst [vmem:[%s283 + $0x10] sm:$0xff] %v1075
        %1152 = vst [vmem:[%s283 + $0x18] sm:$0xff] %v1077
        %1153 = vst [vmem:[%s283 + $0x20] sm:$0xff] %v1080
        %1154 = vst [vmem:[%s283 + $0x28] sm:$0xff] %v1082
        %1155 = vst [vmem:[%s283 + $0x30] sm:$0xff] %v1085
        %1156 = vst [vmem:[%s283 + $0x38] sm:$0xff] %v1087
        %1157 = vst [vmem:[%s283 + $0x40] sm:$0xff] %v1090
        %1158 = vst [vmem:[%s283 + $0x48] sm:$0xff] %v1092
        %1159 = vst [vmem:[%s283 + $0x50] sm:$0xff] %v1095
        %1160 = vst [vmem:[%s283 + $0x58] sm:$0xff] %v1097
        %1161 = vst [vmem:[%s283 + $0x60] sm:$0xff] %v1100
        %1162 = vst [vmem:[%s283 + $0x68] sm:$0xff] %v1102
        %1163 = vst [vmem:[%s283 + $0x70] sm:$0xff] %v1105
        %1164 = vst [vmem:[%s283 + $0x78] sm:$0xff] %v1107
        %1165 = vst [vmem:[%s283 + $0x80] sm:$0xff] %v1110
        %1166 = vst [vmem:[%s283 + $0x88] sm:$0xff] %v1112
        %1167 = vst [vmem:[%s283 + $0x90] sm:$0xff] %v1115
        %1168 = vst [vmem:[%s283 + $0x98] sm:$0xff] %v1117
        %1169 = vst [vmem:[%s283 + $0xa0] sm:$0xff] %v1120
        %1170 = vst [vmem:[%s283 + $0xa8] sm:$0xff] %v1122
        %1171 = vst [vmem:[%s283 + $0xb0] sm:$0xff] %v1125
        %1172 = vst [vmem:[%s283 + $0xb8] sm:$0xff] %v1127
        %1173 = vst [vmem:[%s283 + $0xc0] sm:$0xff] %v1130
        %1174 = vst [vmem:[%s283 + $0xc8] sm:$0xff] %v1132
        %1175 = vst [vmem:[%s283 + $0xd0] sm:$0xff] %v1135
        %1176 = vst [vmem:[%s283 + $0xd8] sm:$0xff] %v1137
        %1177 = vst [vmem:[%s283 + $0xe0] sm:$0xff] %v1140
        %1178 = vst [vmem:[%s283 + $0xe8] sm:$0xff] %v1142
        %1179 = vst [vmem:[%s283 + $0xf0] sm:$0xff] %v1145
        %1180 = vst [vmem:[%s283 + $0xf8] sm:$0xff] %v1147
        %s1181 = sand.u32 %s143, 1
        %s1182 = scalar_lea.sflag [#allocation5], %s1181
        %s1183 = sand.u32 %s143, 1
        %s1184 = smul.addr %s1183, 256
        %s1185 = scalar_lea.vmem [#allocation9], %s1184
        // Predicated region
        $region53: #{tpu_custom_call.1} parent=35 // pred_check
          %p1186 = pneg %p153
        $region54: #{tpu_custom_call.1} parent=35 // pred_check_branch
          %1188 = sbr.rel (%p1186) target = $region56
        $region55: #{tpu_custom_call.1} parent=35 // pred_region
          %s1189 = smul.u32 32, %s26
          %1191 = vsyncadd %s1182, 0
          %s1192 = smul.addr %s1189, 2
          %s1193 = sadd.s32 %s27, %s1192
          %s1194 = smul.addr %s1193, 8
          %s1195 = scalar_lea.hbm %s4, %s1194
          %s1196 = sshll.u32 %s1185, 4
          %s1197 = int_to_ptr.vmem [resolvable:$true] %s1196
          %s1198 = sshll.u32 %s1195, 4
          %s1199 = int_to_ptr.hbm [resolvable:$true] %s1198
          %1204 = dma.vmem_to_hbm [thread:$0]  %s1197, 4096, %s1199, %s1182, 128, 256, 8
        $region56: #{tpu_custom_call.1} parent=35 // pred_fallthru
          _
      $region36: #{tpu_custom_call.1} parent=5 // pred_fallthru
        _
      %p1205 = scmp.le.s32.totalorder 2, %s17
      // Predicated region
      $region57: #{tpu_custom_call.1} parent=5 // pred_check
        %p1206 = pneg %p1205
      $region58: #{tpu_custom_call.1} parent=5 // pred_check_branch
        %1208 = sbr.rel (%p1206) target = $region60
      $region59: #{tpu_custom_call.1} parent=5 // pred_region
        %s1209 = ssub.s32 %s17, 2
        // Predicated region
        $region61: #{tpu_custom_call.1} parent=59 // pred_check
          %p1210 = pneg %p159
        $region62: #{tpu_custom_call.1} parent=59 // pred_check_branch
          %1212 = sbr.rel (%p1210) target = $region64
        $region63: #{tpu_custom_call.1} parent=59 // pred_region
          %s1213 = sand.u32 %s144, 1
          %s1214 = scalar_lea.sflag [#allocation5], %s1213
          %s1215 = sand.u32 %s144, 1
          %s1216 = smul.addr %s1215, 256
          %s1217 = scalar_lea.vmem [#allocation9], %s1216
          %1219 = dma.done %s1214, 4096
        $region64: #{tpu_custom_call.1} parent=59 // pred_fallthru
          _
      $region60: #{tpu_custom_call.1} parent=5 // pred_fallthru
        _
    $region6: #{tpu_custom_call.1} parent=1 // loop_footer
      %s21 = sadd.s32 1, %s17
    $region7: #{tpu_custom_call.1} parent=1 // loop_footer_branch
      %16 = sbr.rel target = $region3
    $region8: #{tpu_custom_call.1} parent=1 // loop_exit
      _
    %1220 = vsyncpa [#allocation4], 1
    %s1221 = scalar_lea.sflag [#allocation4], 1
    %1222 = vsyncpa %s1221, 1
    %1223 = vsyncpa [#allocation7], 1
    %s1224 = scalar_lea.sflag [#allocation7], 1
    %1225 = vsyncpa %s1224, 1
    %1226 = vsyncpa [#allocation5], 1
    %s1227 = scalar_lea.sflag [#allocation5], 1
    %1228 = vsyncpa %s1227, 1

</llo_original>
